<compile_context>
chip_gen: v7x
topology: tpu7x:2x2x1
jax: 0.10.0
libtpu: 0.0.40
codegen_flags: <defaults>
</compile_context>

<pallas_src>
import jax
import jax.numpy as jnp
from jax.experimental import pallas as pl
from jax.experimental.pallas import tpu as pltpu


def _round_up(x, m):
    return (x + m - 1) // m * m


# ---------------------------------------------------------------------------
# Stage 1 kernel: hyperedge features Y2 = theta_e2v(ReLU(W_e D_e^-1 H^T theta_v2e(X)))
# ---------------------------------------------------------------------------
def _stage1_kernel(h_ref, x_ref, w1_ref, b1_ref, w2_ref, b2_ref, we_ref,
                   y2_ref, s_acc, de_acc):
    k = pl.program_id(1)

    @pl.when(k == 0)
    def _init():
        s_acc[...] = jnp.zeros_like(s_acc)
        de_acc[...] = jnp.zeros_like(de_acc)

    h = h_ref[...]                                       # (TV, TE) bf16
    # S += H_tile^T @ X_tile  -> (TE, Cin): the big V-contraction produces only
    # a Cin-wide intermediate (reassociation).
    s_acc[...] += jax.lax.dot_general(
        h, x_ref[...], dimension_numbers=(((0,), (0,)), ((), ())),
        preferred_element_type=jnp.float32)
    # d_e += per-column sums of the same H tile (hyperedge degrees), fused so
    # the degree pass over H costs no extra HBM traffic.
    ones_col = jnp.ones((h.shape[0], 1), dtype=h.dtype)
    de_acc[...] += jax.lax.dot_general(
        h, ones_col, dimension_numbers=(((0,), (0,)), ((), ())),
        preferred_element_type=jnp.float32)

    @pl.when(k == pl.num_programs(1) - 1)
    def _finalize():
        d_e = de_acc[...]                                # (TE, 1)
        inv_de = jnp.where(d_e > 0, 1.0 / d_e, 0.0)
        w_e = we_ref[...]                                # (TE, 1)
        scale = w_e * inv_de                             # diag(W_e) diag(D_e^-1)
        # Exact bias after reassociation: H^T (1 b1^T) = d_e b1^T and d_e
        # cancels against 1/d_e (and is 0 for empty / padded hyperedges).
        bias_scale = jnp.where(d_e > 0, w_e, 0.0)
        e_feat = jnp.dot(s_acc[...], w1_ref[...],
                         preferred_element_type=jnp.float32)
        e_feat = e_feat * scale + bias_scale * b1_ref[...]
        y = jnp.maximum(e_feat, 0.0)                     # v2e activation
        y2 = jnp.dot(y, w2_ref[...],
                     preferred_element_type=jnp.float32) + b2_ref[...]
        y2_ref[...] = y2.astype(y2_ref.dtype)


# ---------------------------------------------------------------------------
# Stage 2 kernel: vertex outputs out = ReLU(D_v^-1 H Y2)
# ---------------------------------------------------------------------------
def _stage2_kernel(h_ref, y2_ref, o_ref, acc, dv_acc):
    k = pl.program_id(1)

    @pl.when(k == 0)
    def _init():
        acc[...] = jnp.zeros_like(acc)
        dv_acc[...] = jnp.zeros_like(dv_acc)

    h = h_ref[...]                                       # (TV, TE) bf16
    acc[...] += jnp.dot(h, y2_ref[...],
                        preferred_element_type=jnp.float32)
    ones_col = jnp.ones((h.shape[1], 1), dtype=h.dtype)
    dv_acc[...] += jnp.dot(h, ones_col,                  # vertex degrees, fused
                           preferred_element_type=jnp.float32)

    @pl.when(k == pl.num_programs(1) - 1)
    def _finalize():
        d_v = dv_acc[...]
        inv_dv = jnp.where(d_v > 0, 1.0 / d_v, 0.0)
        o_ref[...] = jnp.maximum(acc[...] * inv_dv, 0.0).astype(o_ref.dtype)


# ---------------------------------------------------------------------------
# Wrapper
# ---------------------------------------------------------------------------
def hnhn_conv(X, W1, b1, W2, b2, H, w_e):
    """X:(V,Cin) f32   W1:(Cout,Cin)  b1:(Cout,)  W2:(Cout,Cout)  b2:(Cout,)
       H:(V,E) dense 0/1 incidence   w_e:(E,) hyperedge weights."""
    V, Cin = X.shape
    Cout = W1.shape[0]
    E = H.shape[1]

    # Tiling / padding: lane dims must be multiples of 128; Cout padded to 128
    # so all stores are lane-dense.  Tiles keep VMEM usage well under the
    # 32 MiB scoped default on every generation (v5e/v6e/v7x).
    TE = min(512, _round_up(E, 128))
    TV = min(512, _round_up(V, 128))
    E_p, V_p = _round_up(E, TE), _round_up(V, TV)
    Cout_p = _round_up(Cout, 128)

    f32, bf16 = jnp.float32, jnp.bfloat16
    H_p = jnp.pad(H.astype(bf16), ((0, V_p - V), (0, E_p - E)))
    X_p = jnp.pad(X.astype(bf16), ((0, V_p - V), (0, 0)))
    W1T = jnp.pad(W1.T.astype(f32), ((0, 0), (0, Cout_p - Cout)))
    W2T = jnp.pad(W2.T.astype(f32), ((0, Cout_p - Cout), (0, Cout_p - Cout)))
    b1p = jnp.pad(b1.astype(f32), (0, Cout_p - Cout)).reshape(1, Cout_p)
    b2p = jnp.pad(b2.astype(f32), (0, Cout_p - Cout)).reshape(1, Cout_p)
    wep = jnp.pad(w_e.astype(f32), (0, E_p - E)).reshape(E_p, 1)

    cparams = pltpu.CompilerParams(
        dimension_semantics=("parallel", "arbitrary"),
        vmem_limit_bytes=32 * 1024 * 1024)

    # ---- stage 1: hyperedge features (E_p, Cout_p), bf16 ----
    y2 = pl.pallas_call(
        _stage1_kernel,
        out_shape=jax.ShapeDtypeStruct((E_p, Cout_p), bf16),
        grid=(E_p // TE, V_p // TV),
        in_specs=[
            pl.BlockSpec((TV, TE), lambda e, k: (k, e)),           # H (streamed)
            pl.BlockSpec((TV, Cin), lambda e, k: (k, 0)),          # X (streamed over V)
            pl.BlockSpec((Cin, Cout_p), lambda e, k: (0, 0)),      # W1^T (resident)
            pl.BlockSpec((1, Cout_p), lambda e, k: (0, 0)),        # b1   (resident)
            pl.BlockSpec((Cout_p, Cout_p), lambda e, k: (0, 0)),   # W2^T (resident)
            pl.BlockSpec((1, Cout_p), lambda e, k: (0, 0)),        # b2   (resident)
            pl.BlockSpec((TE, 1), lambda e, k: (e, 0)),            # w_e
        ],
        out_specs=pl.BlockSpec((TE, Cout_p), lambda e, k: (e, 0)),
        scratch_shapes=[pltpu.VMEM((TE, Cin), f32),                # S accumulator
                        pltpu.VMEM((TE, 1), f32)],                 # d_e accumulator
        compiler_params=cparams,
    )(H_p, X_p, W1T, b1p, W2T, b2p, wep)

    # ---- stage 2: vertex outputs (V_p, Cout_p), f32 ----
    out_p = pl.pallas_call(
        _stage2_kernel,
        out_shape=jax.ShapeDtypeStruct((V_p, Cout_p), f32),
        grid=(V_p // TV, E_p // TE),
        in_specs=[
            pl.BlockSpec((TV, TE), lambda i, k: (i, k)),           # H (streamed)
            pl.BlockSpec((TE, Cout_p), lambda i, k: (k, 0)),       # Y2 (streamed over E)
        ],
        out_specs=pl.BlockSpec((TV, Cout_p), lambda i, k: (i, 0)),
        scratch_shapes=[pltpu.VMEM((TV, Cout_p), f32),             # H@Y2 accumulator
                        pltpu.VMEM((TV, 1), f32)],                 # d_v accumulator
        compiler_params=cparams,
    )(H_p, y2)

    return out_p[:V, :Cout]


def hnhn_conv_ref(X, W1, b1, W2, b2, H, w_e):
    """Pure-JAX f32 reference mirroring the PyTorch forward (eval mode)."""
    Ht = H.T
    d_e = jnp.sum(Ht, axis=1)
    d_e_inv = jnp.where(d_e > 0, 1.0 / d_e, 0.0)
    d_v = jnp.sum(H, axis=1)
    dv_inv = jnp.where(d_v > 0, 1.0 / d_v, 0.0)

    X1 = X @ W1.T + b1
    Eft = (Ht @ X1) * d_e_inv[:, None]
    Eft = Eft * w_e[:, None]                           # W_e update
    Y = jax.nn.relu(Eft)
    Y2 = Y @ W2.T + b2
    Vft = (H @ Y2) * dv_inv[:, None]
    return jax.nn.relu(Vft)


if __name__ == "__main__":
    V, E, Cin, Cout = 16, 8, 8, 32

    key = jax.random.PRNGKey(0)
    kx, kw1, kb1, kw2, kb2, kh = jax.random.split(key, 6)

    X = jax.random.normal(kx, (V, Cin), dtype=jnp.float32)

    # deterministic "PyTorch-Linear-like" uniform init
    bnd1 = 1.0 / jnp.sqrt(Cin)
    W1 = jax.random.uniform(kw1, (Cout, Cin), minval=-bnd1, maxval=bnd1)
    b1 = jax.random.uniform(kb1, (Cout,), minval=-bnd1, maxval=bnd1)
    bnd2 = 1.0 / jnp.sqrt(Cout)
    W2 = jax.random.uniform(kw2, (Cout, Cout), minval=-bnd2, maxval=bnd2)
    b2 = jax.random.uniform(kb2, (Cout,), minval=-bnd2, maxval=bnd2)

    # synthetic dense incidence matrix (each vertex in >= 1 hyperedge)
    H = (jax.random.uniform(kh, (V, E)) < 0.4).astype(jnp.float32)
    H = H.at[jnp.arange(V), jnp.arange(V) % E].set(1.0)
    w_e = jnp.ones((E,), dtype=jnp.float32)            # default hyperedge weights

    out = hnhn_conv(X, W1, b1, W2, b2, H, w_e)
    jax.block_until_ready(out)

    ref = hnhn_conv_ref(X, W1, b1, W2, b2, H, w_e)
    assert out.shape == (V, Cout)
    # bf16 inputs / intermediates vs f32 reference -> loosened tolerance
    err = float(jnp.max(jnp.abs(out - ref)))
    scale = float(jnp.max(jnp.abs(ref))) + 1e-6
    assert err <= 3e-2 * scale, f"mismatch vs reference: abs err {err}, ref scale {scale}"

    print("KERNEL_OK")
</pallas_src>

<mosaic_0001>
module attributes {stable_mosaic.version = 11 : i64} {
  func.func @_stage1_kernel(%arg0: i32, %arg1: i32, %arg2: memref<128x128xbf16, #tpu.memory_space<vmem>>, %arg3: memref<128x8xbf16, #tpu.memory_space<vmem>>, %arg4: memref<8x128xf32, #tpu.memory_space<vmem>>, %arg5: memref<1x128xf32, #tpu.memory_space<vmem>>, %arg6: memref<128x128xf32, #tpu.memory_space<vmem>>, %arg7: memref<1x128xf32, #tpu.memory_space<vmem>>, %arg8: memref<128x1xf32, #tpu.memory_space<vmem>>, %arg9: memref<128x128xbf16, #tpu.memory_space<vmem>>, %arg10: memref<128x8xf32, #tpu.memory_space<vmem>>, %arg11: memref<128x1xf32, #tpu.memory_space<vmem>>) attributes {dimension_semantics = [#tpu.dimension_semantics<parallel>, #tpu.dimension_semantics<arbitrary>], iteration_bounds = array<i64: 1, 1>, scalar_prefetch = 0 : i64, scratch_operands = 2 : i64, tpu.core_type = #tpu.core_type<tc>, window_params = [{transform_indices = @transform_0, window_bounds = array<i64: 128, 128>}, {transform_indices = @transform_1, window_bounds = array<i64: 128, 8>}, {pipeline_mode = #tpu.pipeline_mode<synchronous>, transform_indices = @transform_2, window_bounds = array<i64: 8, 128>}, {pipeline_mode = #tpu.pipeline_mode<synchronous>, transform_indices = @transform_3, window_bounds = array<i64: 1, 128>}, {pipeline_mode = #tpu.pipeline_mode<synchronous>, transform_indices = @transform_4, window_bounds = array<i64: 128, 128>}, {pipeline_mode = #tpu.pipeline_mode<synchronous>, transform_indices = @transform_5, window_bounds = array<i64: 1, 128>}, {transform_indices = @transform_6, window_bounds = array<i64: 128, 1>}, {transform_indices = @transform_7, window_bounds = array<i64: 128, 128>}]} {
    %c0_i32 = arith.constant 0 : i32
    %0 = arith.cmpi eq, %arg1, %c0_i32 : i32
    %1 = arith.extui %0 : i1 to i32
    %c0_i32_0 = arith.constant 0 : i32
    %2 = arith.cmpi ne, %1, %c0_i32_0 : i32
    scf.if %2 {
      %cst_16 = arith.constant 0.000000e+00 : f32
      %17 = vector.broadcast %cst_16 : f32 to vector<128x8xf32>
      %c0_17 = arith.constant 0 : index
      %c0_18 = arith.constant 0 : index
      %18 = vector.load %arg10[%c0_17, %c0_18] : memref<128x8xf32, #tpu.memory_space<vmem>>, vector<128x8xf32>
      tpu.vector_store %arg10[%c0_17, %c0_18], %17 {strides = array<i32>} : memref<128x8xf32, #tpu.memory_space<vmem>>, vector<128x8xf32>,
      %cst_19 = arith.constant 0.000000e+00 : f32
      %19 = vector.broadcast %cst_19 : f32 to vector<128x1xf32>
      %c0_20 = arith.constant 0 : index
      %c0_21 = arith.constant 0 : index
      %20 = vector.load %arg11[%c0_20, %c0_21] : memref<128x1xf32, #tpu.memory_space<vmem>>, vector<128x1xf32>
      tpu.vector_store %arg11[%c0_20, %c0_21], %19 {strides = array<i32>} : memref<128x1xf32, #tpu.memory_space<vmem>>, vector<128x1xf32>,
    } else {
    }
    %c0 = arith.constant 0 : index
    %c0_1 = arith.constant 0 : index
    %3 = vector.load %arg2[%c0, %c0_1] : memref<128x128xbf16, #tpu.memory_space<vmem>>, vector<128x128xbf16>
    %c0_2 = arith.constant 0 : index
    %c0_3 = arith.constant 0 : index
    %4 = vector.load %arg10[%c0_2, %c0_3] : memref<128x8xf32, #tpu.memory_space<vmem>>, vector<128x8xf32>
    %c0_4 = arith.constant 0 : index
    %c0_5 = arith.constant 0 : index
    %5 = vector.load %arg3[%c0_4, %c0_5] : memref<128x8xbf16, #tpu.memory_space<vmem>>, vector<128x8xbf16>
    %cst = arith.constant dense<0.000000e+00> : vector<128x8xf32>
    %6 = tpu.matmul %3, %5, %cst {dimension_numbers = #tpu.dot_dimension_numbers<[0], [0], [1], [1], [0, 1, 1, 1], [], []>} : vector<128x128xbf16>, vector<128x8xbf16>, vector<128x8xf32> -> vector<128x8xf32>
    %7 = arith.addf %4, %6 : vector<128x8xf32>
    %c0_6 = arith.constant 0 : index
    %c0_7 = arith.constant 0 : index
    %8 = vector.load %arg10[%c0_6, %c0_7] : memref<128x8xf32, #tpu.memory_space<vmem>>, vector<128x8xf32>
    tpu.vector_store %arg10[%c0_6, %c0_7], %7 {strides = array<i32>} : memref<128x8xf32, #tpu.memory_space<vmem>>, vector<128x8xf32>,
    %cst_8 = arith.constant 1.000000e+00 : bf16
    %9 = vector.broadcast %cst_8 : bf16 to vector<128x1xbf16>
    %c0_9 = arith.constant 0 : index
    %c0_10 = arith.constant 0 : index
    %10 = vector.load %arg11[%c0_9, %c0_10] : memref<128x1xf32, #tpu.memory_space<vmem>>, vector<128x1xf32>
    %cst_11 = arith.constant dense<0.000000e+00> : vector<128x1xf32>
    %11 = tpu.matmul %3, %9, %cst_11 {dimension_numbers = #tpu.dot_dimension_numbers<[0], [0], [1], [1], [0, 1, 1, 1], [], []>} : vector<128x128xbf16>, vector<128x1xbf16>, vector<128x1xf32> -> vector<128x1xf32>
    %12 = arith.addf %10, %11 : vector<128x1xf32>
    %c0_12 = arith.constant 0 : index
    %c0_13 = arith.constant 0 : index
    %13 = vector.load %arg11[%c0_12, %c0_13] : memref<128x1xf32, #tpu.memory_space<vmem>>, vector<128x1xf32>
    tpu.vector_store %arg11[%c0_12, %c0_13], %12 {strides = array<i32>} : memref<128x1xf32, #tpu.memory_space<vmem>>, vector<128x1xf32>,
    %c0_i32_14 = arith.constant 0 : i32
    %14 = arith.cmpi eq, %arg1, %c0_i32_14 : i32
    %15 = arith.extui %14 : i1 to i32
    %c0_i32_15 = arith.constant 0 : i32
    %16 = arith.cmpi ne, %15, %c0_i32_15 : i32
    scf.if %16 {
      %c0_16 = arith.constant 0 : index
      %c0_17 = arith.constant 0 : index
      %17 = vector.load %arg11[%c0_16, %c0_17] : memref<128x1xf32, #tpu.memory_space<vmem>>, vector<128x1xf32>
      %cst_18 = arith.constant 0.000000e+00 : f32
      %18 = vector.broadcast %cst_18 : f32 to vector<128x1xf32>
      %19 = arith.cmpf ogt, %17, %18 : vector<128x1xf32>
      %cst_19 = arith.constant 1.000000e+00 : f32
      %20 = vector.broadcast %cst_19 : f32 to vector<128x1xf32>
      %21 = arith.divf %20, %17 : vector<128x1xf32>
      %cst_20 = arith.constant 0.000000e+00 : f32
      %22 = vector.broadcast %cst_20 : f32 to vector<128x1xf32>
      %23 = arith.select %19, %21, %22 : vector<128x1xi1>, vector<128x1xf32>
      %c0_21 = arith.constant 0 : index
      %c0_22 = arith.constant 0 : index
      %24 = vector.load %arg8[%c0_21, %c0_22] : memref<128x1xf32, #tpu.memory_space<vmem>>, vector<128x1xf32>
      %25 = arith.mulf %24, %23 : vector<128x1xf32>
      %cst_23 = arith.constant 0.000000e+00 : f32
      %26 = vector.broadcast %cst_23 : f32 to vector<128x1xf32>
      %27 = arith.cmpf ogt, %17, %26 : vector<128x1xf32>
      %cst_24 = arith.constant 0.000000e+00 : f32
      %28 = vector.broadcast %cst_24 : f32 to vector<128x1xf32>
      %29 = arith.select %27, %24, %28 : vector<128x1xi1>, vector<128x1xf32>
      %c0_25 = arith.constant 0 : index
      %c0_26 = arith.constant 0 : index
      %30 = vector.load %arg10[%c0_25, %c0_26] : memref<128x8xf32, #tpu.memory_space<vmem>>, vector<128x8xf32>
      %c0_27 = arith.constant 0 : index
      %c0_28 = arith.constant 0 : index
      %31 = vector.load %arg4[%c0_27, %c0_28] : memref<8x128xf32, #tpu.memory_space<vmem>>, vector<8x128xf32>
      %cst_29 = arith.constant dense<0.000000e+00> : vector<128x128xf32>
      %32 = tpu.matmul %30, %31, %cst_29 {dimension_numbers = #tpu.dot_dimension_numbers<[1], [0], [0], [1], [0, 0, 1, 1], [], []>} : vector<128x8xf32>, vector<8x128xf32>, vector<128x128xf32> -> vector<128x128xf32>
      %33 = vector.broadcast %25 : vector<128x1xf32> to vector<128x128xf32>
      %34 = arith.mulf %32, %33 : vector<128x128xf32>
      %c0_30 = arith.constant 0 : index
      %c0_31 = arith.constant 0 : index
      %35 = vector.load %arg5[%c0_30, %c0_31] : memref<1x128xf32, #tpu.memory_space<vmem>>, vector<1x128xf32>
      %36 = vector.broadcast %29 : vector<128x1xf32> to vector<128x128xf32>
      %37 = vector.broadcast %35 : vector<1x128xf32> to vector<128x128xf32>
      %38 = arith.mulf %36, %37 : vector<128x128xf32>
      %39 = arith.addf %34, %38 : vector<128x128xf32>
      %cst_32 = arith.constant 0.000000e+00 : f32
      %40 = vector.broadcast %cst_32 : f32 to vector<128x128xf32>
      %41 = arith.maximumf %39, %40 : vector<128x128xf32>
      %c0_33 = arith.constant 0 : index
      %c0_34 = arith.constant 0 : index
      %42 = vector.load %arg6[%c0_33, %c0_34] : memref<128x128xf32, #tpu.memory_space<vmem>>, vector<128x128xf32>
      %cst_35 = arith.constant dense<0.000000e+00> : vector<128x128xf32>
      %43 = tpu.matmul %41, %42, %cst_35 {dimension_numbers = #tpu.dot_dimension_numbers<[1], [0], [0], [1], [0, 0, 1, 1], [], []>} : vector<128x128xf32>, vector<128x128xf32>, vector<128x128xf32> -> vector<128x128xf32>
      %c0_36 = arith.constant 0 : index
      %c0_37 = arith.constant 0 : index
      %44 = vector.load %arg7[%c0_36, %c0_37] : memref<1x128xf32, #tpu.memory_space<vmem>>, vector<1x128xf32>
      %45 = vector.broadcast %44 : vector<1x128xf32> to vector<128x128xf32>
      %46 = arith.addf %43, %45 : vector<128x128xf32>
      %47 = arith.truncf %46 : vector<128x128xf32> to vector<128x128xbf16>
      %c0_38 = arith.constant 0 : index
      %c0_39 = arith.constant 0 : index
      %48 = vector.load %arg9[%c0_38, %c0_39] : memref<128x128xbf16, #tpu.memory_space<vmem>>, vector<128x128xbf16>
      tpu.vector_store %arg9[%c0_38, %c0_39], %47 {strides = array<i32>} : memref<128x128xbf16, #tpu.memory_space<vmem>>, vector<128x128xbf16>,
    } else {
    }
    return
  }
  func.func @transform_0(%arg0: i32, %arg1: i32) -> (i32, i32) {
    %c0_i32 = arith.constant 0 : i32
    return %arg1, %arg0 : i32, i32
  }
  func.func @transform_1(%arg0: i32, %arg1: i32) -> (i32, i32) {
    %c0_i32 = arith.constant 0 : i32
    %c0_i32_0 = arith.constant 0 : i32
    return %arg1, %c0_i32 : i32, i32
  }
  func.func @transform_2(%arg0: i32, %arg1: i32) -> (i32, i32) {
    %c0_i32 = arith.constant 0 : i32
    %c0_i32_0 = arith.constant 0 : i32
    %c0_i32_1 = arith.constant 0 : i32
    return %c0_i32, %c0_i32_0 : i32, i32
  }
  func.func @transform_3(%arg0: i32, %arg1: i32) -> (i32, i32) {
    %c0_i32 = arith.constant 0 : i32
    %c0_i32_0 = arith.constant 0 : i32
    %c0_i32_1 = arith.constant 0 : i32
    return %c0_i32, %c0_i32_0 : i32, i32
  }
  func.func @transform_4(%arg0: i32, %arg1: i32) -> (i32, i32) {
    %c0_i32 = arith.constant 0 : i32
    %c0_i32_0 = arith.constant 0 : i32
    %c0_i32_1 = arith.constant 0 : i32
    return %c0_i32, %c0_i32_0 : i32, i32
  }
  func.func @transform_5(%arg0: i32, %arg1: i32) -> (i32, i32) {
    %c0_i32 = arith.constant 0 : i32
    %c0_i32_0 = arith.constant 0 : i32
    %c0_i32_1 = arith.constant 0 : i32
    return %c0_i32, %c0_i32_0 : i32, i32
  }
  func.func @transform_6(%arg0: i32, %arg1: i32) -> (i32, i32) {
    %c0_i32 = arith.constant 0 : i32
    %c0_i32_0 = arith.constant 0 : i32
    return %arg0, %c0_i32 : i32, i32
  }
  func.func @transform_7(%arg0: i32, %arg1: i32) -> (i32, i32) {
    %c0_i32 = arith.constant 0 : i32
    %c0_i32_0 = arith.constant 0 : i32
    return %arg0, %c0_i32 : i32, i32
  }
}

</mosaic_0001>

<llo_original>
// kernel: tpu_custom_call.1
$region0: #{tpu_custom_call.1}
  #allocation0 [shape = 'u32[]', space=smem, size = 0x4, offset = 0x4, fixed_abs, tag = 'smem constant byte address 0x4 - core index']
  #allocation1 [shape = 'u32[144,128]{1,0:T(1,128)}', space=vmem, size = 0x12000, scoped, tag = 'internal scratch']
  #allocation2 [shape = 'f32[128,8]{1,0:T(8,128)}', space=vmem, size = 0x10000, scoped, tag = 'scratch operand']
  #allocation3 [shape = 'f32[128,1]{1,0:T(8,128)}', space=vmem, size = 0x10000, scoped, tag = 'scratch operand']
  %s0 = inlined_call_operand.vmem [shape: bf16[128,128], index: 0, kind: input, shape index: {}]
  %s1 = inlined_call_operand.vmem [shape: bf16[128,8], index: 1, kind: input, shape index: {}]
  %s2 = inlined_call_operand.vmem [shape: f32[8,128], index: 2, kind: input, shape index: {}]
  %s3 = inlined_call_operand.vmem [shape: f32[1,128], index: 3, kind: input, shape index: {}]
  %s4 = inlined_call_operand.vmem [shape: f32[128,128], index: 4, kind: input, shape index: {}]
  %s5 = inlined_call_operand.vmem [shape: f32[1,128], index: 5, kind: input, shape index: {}]
  %s6 = inlined_call_operand.vmem [shape: f32[128,1], index: 6, kind: input, shape index: {}]
  %s7 = inlined_call_operand.hbm [shape: bf16[128,128], index: 7, kind: output, shape index: {}]
  %s8 = sld [smem:[#allocation0]]
  $region46: #{tpu_custom_call.1} parent=0
    _
  %s10 = ssub.s32 1, %s8
  %s11 = scalar_select 0, %s10, %s8
  $region1: #{tpu_custom_call.1} parent=0
    #allocation4 [shape = 'u8[32768]{0}', space=vmem, size = 0x8000, scoped, tag = 'output window, operand 0, single buffered']
    #allocation5 [shape = 's32[1]{0}', space=sflag, size = 0x4, scoped, tag = 'scoped memory for tpu_custom_call.1']
    %12 = vsyncpa [#allocation5], 0
    // Predicated region
    $region2: #{tpu_custom_call.1} parent=1 // pred_check
      _
    $region3: #{tpu_custom_call.1} parent=1 // pred_check_branch
      %14 = sbr.rel (0) target = $region5
    $region4: #{tpu_custom_call.1} parent=1 // pred_region
      _
    $region5: #{tpu_custom_call.1} parent=1 // pred_fallthru
      _
    // Predicated region
    $region6: #{tpu_custom_call.1} parent=1 // pred_check
      _
    $region7: #{tpu_custom_call.1} parent=1 // pred_check_branch
      %16 = sbr.rel (0) target = $region9
    $region8: #{tpu_custom_call.1} parent=1 // pred_region
      _
    $region9: #{tpu_custom_call.1} parent=1 // pred_fallthru
      _
    // Predicated region
    $region10: #{tpu_custom_call.1} parent=1 // pred_check
      _
    $region11: #{tpu_custom_call.1} parent=1 // pred_check_branch
      %18 = sbr.rel (0) target = $region13
    $region12: #{tpu_custom_call.1} parent=1 // pred_region
      _
    $region13: #{tpu_custom_call.1} parent=1 // pred_fallthru
      _
    // Predicated region
    $region14: #{tpu_custom_call.1} parent=1 // pred_check
      _
    $region15: #{tpu_custom_call.1} parent=1 // pred_check_branch
      %20 = sbr.rel (0) target = $region17
    $region16: #{tpu_custom_call.1} parent=1 // pred_region
      _
    $region17: #{tpu_custom_call.1} parent=1 // pred_fallthru
      _
    // Predicated region
    $region18: #{tpu_custom_call.1} parent=1 // pred_check
      _
    $region19: #{tpu_custom_call.1} parent=1 // pred_check_branch
      %22 = sbr.rel (0) target = $region21
    $region20: #{tpu_custom_call.1} parent=1 // pred_region
      _
    $region21: #{tpu_custom_call.1} parent=1 // pred_fallthru
      _
    // Predicated region
    $region22: #{tpu_custom_call.1} parent=1 // pred_check
      _
    $region23: #{tpu_custom_call.1} parent=1 // pred_check_branch
      %24 = sbr.rel (0) target = $region25
    $region24: #{tpu_custom_call.1} parent=1 // pred_region
      _
    $region25: #{tpu_custom_call.1} parent=1 // pred_fallthru
      _
    // Predicated region
    $region26: #{tpu_custom_call.1} parent=1 // pred_check
      _
    $region27: #{tpu_custom_call.1} parent=1 // pred_check_branch
      %26 = sbr.rel (0) target = $region29
    $region28: #{tpu_custom_call.1} parent=1 // pred_region
      _
    $region29: #{tpu_custom_call.1} parent=1 // pred_fallthru
      _
    %p29 = scmp.eq.s32.totalorder 0, 0
    // Predicated region
    $region30: #{tpu_custom_call.1} parent=1 // pred_check
      %p30 = pneg %p29
    $region31: #{tpu_custom_call.1} parent=1 // pred_check_branch
      %32 = sbr.rel (%p30) target = $region33
    $region32: #{tpu_custom_call.1} parent=1 // pred_region
      %vm33 = vcmask 64512
      %34 = vst.msk [vmem:[#allocation2] sm:$0xff] %vm33, 0.0
      %35 = vst.msk [vmem:[#allocation2 + $0x8] sm:$0xff] %vm33, 0.0
      %36 = vst.msk [vmem:[#allocation2 + $0x10] sm:$0xff] %vm33, 0.0
      %37 = vst.msk [vmem:[#allocation2 + $0x18] sm:$0xff] %vm33, 0.0
      %38 = vst.msk [vmem:[#allocation2 + $0x20] sm:$0xff] %vm33, 0.0
      %39 = vst.msk [vmem:[#allocation2 + $0x28] sm:$0xff] %vm33, 0.0
      %40 = vst.msk [vmem:[#allocation2 + $0x30] sm:$0xff] %vm33, 0.0
      %41 = vst.msk [vmem:[#allocation2 + $0x38] sm:$0xff] %vm33, 0.0
      %42 = vst.msk [vmem:[#allocation2 + $0x40] sm:$0xff] %vm33, 0.0
      %43 = vst.msk [vmem:[#allocation2 + $0x48] sm:$0xff] %vm33, 0.0
      %44 = vst.msk [vmem:[#allocation2 + $0x50] sm:$0xff] %vm33, 0.0
      %45 = vst.msk [vmem:[#allocation2 + $0x58] sm:$0xff] %vm33, 0.0
      %46 = vst.msk [vmem:[#allocation2 + $0x60] sm:$0xff] %vm33, 0.0
      %47 = vst.msk [vmem:[#allocation2 + $0x68] sm:$0xff] %vm33, 0.0
      %48 = vst.msk [vmem:[#allocation2 + $0x70] sm:$0xff] %vm33, 0.0
      %49 = vst.msk [vmem:[#allocation2 + $0x78] sm:$0xff] %vm33, 0.0
      %vm50 = vcmask 7168
      %51 = vst.msk [vmem:[#allocation3] sm:$0xff] %vm50, 0.0
      %52 = vst.msk [vmem:[#allocation3 + $0x8] sm:$0xff] %vm50, 0.0
      %53 = vst.msk [vmem:[#allocation3 + $0x10] sm:$0xff] %vm50, 0.0
      %54 = vst.msk [vmem:[#allocation3 + $0x18] sm:$0xff] %vm50, 0.0
      %55 = vst.msk [vmem:[#allocation3 + $0x20] sm:$0xff] %vm50, 0.0
      %56 = vst.msk [vmem:[#allocation3 + $0x28] sm:$0xff] %vm50, 0.0
      %57 = vst.msk [vmem:[#allocation3 + $0x30] sm:$0xff] %vm50, 0.0
      %58 = vst.msk [vmem:[#allocation3 + $0x38] sm:$0xff] %vm50, 0.0
      %59 = vst.msk [vmem:[#allocation3 + $0x40] sm:$0xff] %vm50, 0.0
      %60 = vst.msk [vmem:[#allocation3 + $0x48] sm:$0xff] %vm50, 0.0
      %61 = vst.msk [vmem:[#allocation3 + $0x50] sm:$0xff] %vm50, 0.0
      %62 = vst.msk [vmem:[#allocation3 + $0x58] sm:$0xff] %vm50, 0.0
      %63 = vst.msk [vmem:[#allocation3 + $0x60] sm:$0xff] %vm50, 0.0
      %64 = vst.msk [vmem:[#allocation3 + $0x68] sm:$0xff] %vm50, 0.0
      %65 = vst.msk [vmem:[#allocation3 + $0x70] sm:$0xff] %vm50, 0.0
      %66 = vst.msk [vmem:[#allocation3 + $0x78] sm:$0xff] %vm50, 0.0
    $region33: #{tpu_custom_call.1} parent=1 // pred_fallthru
      _
    %v67 = vld [vmem:[%s0] sm:$0xf]
    %v68 = vld [vmem:[%s0 + $0x4] sm:$0xf]
    %v69 = vld [vmem:[%s0 + $0x8] sm:$0xf]
    %v70 = vld [vmem:[%s0 + $0xc] sm:$0xf]
    %v71 = vld [vmem:[%s0 + $0x10] sm:$0xf]
    %v72 = vld [vmem:[%s0 + $0x14] sm:$0xf]
    %v73 = vld [vmem:[%s0 + $0x18] sm:$0xf]
    %v74 = vld [vmem:[%s0 + $0x1c] sm:$0xf]
    %v75 = vld [vmem:[%s0 + $0x20] sm:$0xf]
    %v76 = vld [vmem:[%s0 + $0x24] sm:$0xf]
    %v77 = vld [vmem:[%s0 + $0x28] sm:$0xf]
    %v78 = vld [vmem:[%s0 + $0x2c] sm:$0xf]
    %v79 = vld [vmem:[%s0 + $0x30] sm:$0xf]
    %v80 = vld [vmem:[%s0 + $0x34] sm:$0xf]
    %v81 = vld [vmem:[%s0 + $0x38] sm:$0xf]
    %v82 = vld [vmem:[%s0 + $0x3c] sm:$0xf]
    %v83 = vld [vmem:[#allocation2] sm:$0xff]
    %v84 = vld [vmem:[#allocation2 + $0x8] sm:$0xff]
    %v85 = vld [vmem:[#allocation2 + $0x10] sm:$0xff]
    %v86 = vld [vmem:[#allocation2 + $0x18] sm:$0xff]
    %v87 = vld [vmem:[#allocation2 + $0x20] sm:$0xff]
    %v88 = vld [vmem:[#allocation2 + $0x28] sm:$0xff]
    %v89 = vld [vmem:[#allocation2 + $0x30] sm:$0xff]
    %v90 = vld [vmem:[#allocation2 + $0x38] sm:$0xff]
    %v91 = vld [vmem:[#allocation2 + $0x40] sm:$0xff]
    %v92 = vld [vmem:[#allocation2 + $0x48] sm:$0xff]
    %v93 = vld [vmem:[#allocation2 + $0x50] sm:$0xff]
    %v94 = vld [vmem:[#allocation2 + $0x58] sm:$0xff]
    %v95 = vld [vmem:[#allocation2 + $0x60] sm:$0xff]
    %v96 = vld [vmem:[#allocation2 + $0x68] sm:$0xff]
    %v97 = vld [vmem:[#allocation2 + $0x70] sm:$0xff]
    %v98 = vld [vmem:[#allocation2 + $0x78] sm:$0xff]
    %v99 = vld [vmem:[%s1] sm:$0xf]
    %v100 = vld [vmem:[%s1 + $0x4] sm:$0xf]
    %v101 = vld [vmem:[%s1 + $0x8] sm:$0xf]
    %v102 = vld [vmem:[%s1 + $0xc] sm:$0xf]
    %v103 = vld [vmem:[%s1 + $0x10] sm:$0xf]
    %v104 = vld [vmem:[%s1 + $0x14] sm:$0xf]
    %v105 = vld [vmem:[%s1 + $0x18] sm:$0xf]
    %v106 = vld [vmem:[%s1 + $0x1c] sm:$0xf]
    %v107 = vld [vmem:[%s1 + $0x20] sm:$0xf]
    %v108 = vld [vmem:[%s1 + $0x24] sm:$0xf]
    %v109 = vld [vmem:[%s1 + $0x28] sm:$0xf]
    %v110 = vld [vmem:[%s1 + $0x2c] sm:$0xf]
    %v111 = vld [vmem:[%s1 + $0x30] sm:$0xf]
    %v112 = vld [vmem:[%s1 + $0x34] sm:$0xf]
    %v113 = vld [vmem:[%s1 + $0x38] sm:$0xf]
    %v114 = vld [vmem:[%s1 + $0x3c] sm:$0xf]
    %v131 = vunpack.c.l.b16 %v67
    %v132 = vunpack.c.l.b16 %v68
    %v133 = vunpack.c.l.b16 %v69
    %v134 = vunpack.c.l.b16 %v70
    %v135 = vunpack.c.l.b16 %v71
    %v136 = vunpack.c.l.b16 %v72
    %v137 = vunpack.c.l.b16 %v73
    %v138 = vunpack.c.l.b16 %v74
    %v139 = vunpack.c.l.b16 %v75
    %v140 = vunpack.c.l.b16 %v76
    %v141 = vunpack.c.l.b16 %v77
    %v142 = vunpack.c.l.b16 %v78
    %v143 = vunpack.c.l.b16 %v79
    %v144 = vunpack.c.l.b16 %v80
    %v145 = vunpack.c.l.b16 %v81
    %v146 = vunpack.c.l.b16 %v82
    %v147 = vpack.c.b16 %v132, %v131
    %v148 = vpack.c.b16 %v134, %v133
    %v149 = vpack.c.b16 %v136, %v135
    %v150 = vpack.c.b16 %v138, %v137
    %v151 = vpack.c.b16 %v140, %v139
    %v152 = vpack.c.b16 %v142, %v141
    %v153 = vpack.c.b16 %v144, %v143
    %v154 = vpack.c.b16 %v146, %v145
    %163 = vxpose.xlu0.c.b16.start [1/8] %v147, 128
    %164 = vxpose.xlu0.c.b16.cont [2/8] %v148, 128
    %165 = vxpose.xlu0.c.b16.cont [3/8] %v149, 128
    %166 = vxpose.xlu0.c.b16.cont [4/8] %v150, 128
    %167 = vxpose.xlu0.c.b16.cont [5/8] %v151, 128
    %168 = vxpose.xlu0.c.b16.cont [6/8] %v152, 128
    %169 = vxpose.xlu0.c.b16.cont [7/8] %v153, 128
    %170 = vxpose.xlu0.c.b16.end [8/8] %v154, 128
    %v171 = vpop.trf.xlu0
    %v172 = vpop.trf.xlu0
    %v173 = vpop.trf.xlu0
    %v174 = vpop.trf.xlu0
    %v175 = vpop.trf.xlu0
    %v176 = vpop.trf.xlu0
    %v177 = vpop.trf.xlu0
    %v178 = vpop.trf.xlu0
    %v195 = vunpack.c.l.b16 %v99
    %v196 = vunpack.c.l.b16 %v100
    %v197 = vunpack.c.l.b16 %v101
    %v198 = vunpack.c.l.b16 %v102
    %v199 = vunpack.c.l.b16 %v103
    %v200 = vunpack.c.l.b16 %v104
    %v201 = vunpack.c.l.b16 %v105
    %v202 = vunpack.c.l.b16 %v106
    %v203 = vunpack.c.l.b16 %v107
    %v204 = vunpack.c.l.b16 %v108
    %v205 = vunpack.c.l.b16 %v109
    %v206 = vunpack.c.l.b16 %v110
    %v207 = vunpack.c.l.b16 %v111
    %v208 = vunpack.c.l.b16 %v112
    %v209 = vunpack.c.l.b16 %v113
    %v210 = vunpack.c.l.b16 %v114
    %v211 = vpack.c.b16 %v196, %v195
    %v212 = vpack.c.b16 %v198, %v197
    %v213 = vpack.c.b16 %v200, %v199
    %v214 = vpack.c.b16 %v202, %v201
    %v215 = vpack.c.b16 %v204, %v203
    %v216 = vpack.c.b16 %v206, %v205
    %v217 = vpack.c.b16 %v208, %v207
    %v218 = vpack.c.b16 %v210, %v209
    %227 = vmatprep.subr.bf16.mxu0 0
    %228 = vmatpush1.bf16.msra.mxu0 %v211
    %229 = vmatprep.subr.bf16.mxu0 0
    %230 = vmatpush1.bf16.msra.mxu0 %v212
    %231 = vmatprep.subr.bf16.mxu0 0
    %232 = vmatpush1.bf16.msra.mxu0 %v213
    %233 = vmatprep.subr.bf16.mxu0 0
    %234 = vmatpush1.bf16.msra.mxu0 %v214
    %235 = vmatprep.subr.bf16.mxu0 0
    %236 = vmatpush1.bf16.msra.mxu0 %v215
    %237 = vmatprep.subr.bf16.mxu0 0
    %238 = vmatpush1.bf16.msra.mxu0 %v216
    %239 = vmatprep.subr.bf16.mxu0 0
    %240 = vmatpush1.bf16.msra.mxu0 %v217
    %241 = vmatprep.subr.bf16.mxu0 0
    %242 = vmatpush1.bf16.msra.mxu0 %v218
    %243 = vmatprep.subr.bf16.mxu0 0
    %244 = vmatpush1.bf16.msra.mxu0 0
    %245 = vmatprep.subr.bf16.mxu0 0
    %246 = vmatpush1.bf16.msra.mxu0 0
    %247 = vmatprep.subr.bf16.mxu0 0
    %248 = vmatpush1.bf16.msra.mxu0 0
    %249 = vmatprep.subr.bf16.mxu0 0
    %250 = vmatpush1.bf16.msra.mxu0 0
    %251 = vmatprep.subr.bf16.mxu0 0
    %252 = vmatpush1.bf16.msra.mxu0 0
    %253 = vmatprep.subr.bf16.mxu0 0
    %254 = vmatpush1.bf16.msra.mxu0 0
    %255 = vmatprep.subr.bf16.mxu0 0
    %256 = vmatpush1.bf16.msra.mxu0 0
    %257 = vmatprep.subr.bf16.mxu0 0
    %258 = vmatpush1.bf16.msra.mxu0 0
    %259 = vmatprep.mubr.bf16.mxu0 0
    %260 = vmatmul.mubr.bf16.gmra.mrb[0].mxu0 %v171
    %v261 = vpop.f32.mrb[0].mxu0
    %v262 = vadd.f32 0.0, %v261
    %v263 = vpop.f32.mrb[0].mxu0
    %v264 = vpop.f32.mrb[0].mxu0
    %v265 = vadd.f32 0.0, %v264
    %v266 = vpop.f32.mrb[0].mxu0
    %267 = vmatprep.mubr.bf16.mxu0 0
    %268 = vmatmul.mubr.bf16.gmra.mrb[0].mxu0 %v172
    %v269 = vpop.f32.mrb[0].mxu0
    %v270 = vadd.f32 0.0, %v269
    %v271 = vpop.f32.mrb[0].mxu0
    %v272 = vpop.f32.mrb[0].mxu0
    %v273 = vadd.f32 0.0, %v272
    %v274 = vpop.f32.mrb[0].mxu0
    %275 = vmatprep.mubr.bf16.mxu0 0
    %276 = vmatmul.mubr.bf16.gmra.mrb[0].mxu0 %v173
    %v277 = vpop.f32.mrb[0].mxu0
    %v278 = vadd.f32 0.0, %v277
    %v279 = vpop.f32.mrb[0].mxu0
    %v280 = vpop.f32.mrb[0].mxu0
    %v281 = vadd.f32 0.0, %v280
    %v282 = vpop.f32.mrb[0].mxu0
    %283 = vmatprep.mubr.bf16.mxu0 0
    %284 = vmatmul.mubr.bf16.gmra.mrb[0].mxu0 %v174
    %v285 = vpop.f32.mrb[0].mxu0
    %v286 = vadd.f32 0.0, %v285
    %v287 = vpop.f32.mrb[0].mxu0
    %v288 = vpop.f32.mrb[0].mxu0
    %v289 = vadd.f32 0.0, %v288
    %v290 = vpop.f32.mrb[0].mxu0
    %291 = vmatprep.mubr.bf16.mxu0 0
    %292 = vmatmul.mubr.bf16.gmra.mrb[0].mxu0 %v175
    %v293 = vpop.f32.mrb[0].mxu0
    %v294 = vadd.f32 0.0, %v293
    %v295 = vpop.f32.mrb[0].mxu0
    %v296 = vpop.f32.mrb[0].mxu0
    %v297 = vadd.f32 0.0, %v296
    %v298 = vpop.f32.mrb[0].mxu0
    %299 = vmatprep.mubr.bf16.mxu0 0
    %300 = vmatmul.mubr.bf16.gmra.mrb[0].mxu0 %v176
    %v301 = vpop.f32.mrb[0].mxu0
    %v302 = vadd.f32 0.0, %v301
    %v303 = vpop.f32.mrb[0].mxu0
    %v304 = vpop.f32.mrb[0].mxu0
    %v305 = vadd.f32 0.0, %v304
    %v306 = vpop.f32.mrb[0].mxu0
    %307 = vmatprep.mubr.bf16.mxu0 0
    %308 = vmatmul.mubr.bf16.gmra.mrb[0].mxu0 %v177
    %v309 = vpop.f32.mrb[0].mxu0
    %v310 = vadd.f32 0.0, %v309
    %v311 = vpop.f32.mrb[0].mxu0
    %v312 = vpop.f32.mrb[0].mxu0
    %v313 = vadd.f32 0.0, %v312
    %v314 = vpop.f32.mrb[0].mxu0
    %315 = vmatprep.mubr.bf16.mxu0 0
    %316 = vmatmul.mubr.bf16.gmra.mrb[0].mxu0 %v178
    %v317 = vpop.f32.mrb[0].mxu0
    %v318 = vadd.f32 0.0, %v317
    %v319 = vpop.f32.mrb[0].mxu0
    %v320 = vpop.f32.mrb[0].mxu0
    %v321 = vadd.f32 0.0, %v320
    %v322 = vpop.f32.mrb[0].mxu0
    %323 = vdwg.mxu0
    %v324 = vadd.f32 %v83, %v262
    %v325 = vadd.f32 %v84, %v265
    %v326 = vadd.f32 %v85, %v270
    %v327 = vadd.f32 %v86, %v273
    %v328 = vadd.f32 %v87, %v278
    %v329 = vadd.f32 %v88, %v281
    %v330 = vadd.f32 %v89, %v286
    %v331 = vadd.f32 %v90, %v289
    %v332 = vadd.f32 %v91, %v294
    %v333 = vadd.f32 %v92, %v297
    %v334 = vadd.f32 %v93, %v302
    %v335 = vadd.f32 %v94, %v305
    %v336 = vadd.f32 %v95, %v310
    %v337 = vadd.f32 %v96, %v313
    %v338 = vadd.f32 %v97, %v318
    %v339 = vadd.f32 %v98, %v321
    %vm340 = vcmask 64512
    %341 = vst.msk [vmem:[#allocation2] sm:$0xff] %vm340, %v324
    %342 = vst.msk [vmem:[#allocation2 + $0x8] sm:$0xff] %vm340, %v325
    %343 = vst.msk [vmem:[#allocation2 + $0x10] sm:$0xff] %vm340, %v326
    %344 = vst.msk [vmem:[#allocation2 + $0x18] sm:$0xff] %vm340, %v327
    %345 = vst.msk [vmem:[#allocation2 + $0x20] sm:$0xff] %vm340, %v328
    %346 = vst.msk [vmem:[#allocation2 + $0x28] sm:$0xff] %vm340, %v329
    %347 = vst.msk [vmem:[#allocation2 + $0x30] sm:$0xff] %vm340, %v330
    %348 = vst.msk [vmem:[#allocation2 + $0x38] sm:$0xff] %vm340, %v331
    %349 = vst.msk [vmem:[#allocation2 + $0x40] sm:$0xff] %vm340, %v332
    %350 = vst.msk [vmem:[#allocation2 + $0x48] sm:$0xff] %vm340, %v333
    %351 = vst.msk [vmem:[#allocation2 + $0x50] sm:$0xff] %vm340, %v334
    %352 = vst.msk [vmem:[#allocation2 + $0x58] sm:$0xff] %vm340, %v335
    %353 = vst.msk [vmem:[#allocation2 + $0x60] sm:$0xff] %vm340, %v336
    %354 = vst.msk [vmem:[#allocation2 + $0x68] sm:$0xff] %vm340, %v337
    %355 = vst.msk [vmem:[#allocation2 + $0x70] sm:$0xff] %vm340, %v338
    %356 = vst.msk [vmem:[#allocation2 + $0x78] sm:$0xff] %vm340, %v339
    %v357 = vld [vmem:[#allocation3] sm:$0xff]
    %v358 = vld [vmem:[#allocation3 + $0x8] sm:$0xff]
    %v359 = vld [vmem:[#allocation3 + $0x10] sm:$0xff]
    %v360 = vld [vmem:[#allocation3 + $0x18] sm:$0xff]
    %v361 = vld [vmem:[#allocation3 + $0x20] sm:$0xff]
    %v362 = vld [vmem:[#allocation3 + $0x28] sm:$0xff]
    %v363 = vld [vmem:[#allocation3 + $0x30] sm:$0xff]
    %v364 = vld [vmem:[#allocation3 + $0x38] sm:$0xff]
    %v365 = vld [vmem:[#allocation3 + $0x40] sm:$0xff]
    %v366 = vld [vmem:[#allocation3 + $0x48] sm:$0xff]
    %v367 = vld [vmem:[#allocation3 + $0x50] sm:$0xff]
    %v368 = vld [vmem:[#allocation3 + $0x58] sm:$0xff]
    %v369 = vld [vmem:[#allocation3 + $0x60] sm:$0xff]
    %v370 = vld [vmem:[#allocation3 + $0x68] sm:$0xff]
    %v371 = vld [vmem:[#allocation3 + $0x70] sm:$0xff]
    %v372 = vld [vmem:[#allocation3 + $0x78] sm:$0xff]
    %373 = vmatprep.subr.bf16.mxu0 0
    %374 = vmatpush1.bf16.msra.mxu0 1065369472
    %375 = vmatprep.subr.bf16.mxu0 0
    %376 = vmatpush1.bf16.msra.mxu0 1065369472
    %377 = vmatprep.subr.bf16.mxu0 0
    %378 = vmatpush1.bf16.msra.mxu0 1065369472
    %379 = vmatprep.subr.bf16.mxu0 0
    %380 = vmatpush1.bf16.msra.mxu0 1065369472
    %381 = vmatprep.subr.bf16.mxu0 0
    %382 = vmatpush1.bf16.msra.mxu0 1065369472
    %383 = vmatprep.subr.bf16.mxu0 0
    %384 = vmatpush1.bf16.msra.mxu0 1065369472
    %385 = vmatprep.subr.bf16.mxu0 0
    %386 = vmatpush1.bf16.msra.mxu0 1065369472
    %387 = vmatprep.subr.bf16.mxu0 0
    %388 = vmatpush1.bf16.msra.mxu0 1065369472
    %389 = vmatprep.subr.bf16.mxu0 0
    %390 = vmatpush1.bf16.msra.mxu0 0
    %391 = vmatprep.subr.bf16.mxu0 0
    %392 = vmatpush1.bf16.msra.mxu0 0
    %393 = vmatprep.subr.bf16.mxu0 0
    %394 = vmatpush1.bf16.msra.mxu0 0
    %395 = vmatprep.subr.bf16.mxu0 0
    %396 = vmatpush1.bf16.msra.mxu0 0
    %397 = vmatprep.subr.bf16.mxu0 0
    %398 = vmatpush1.bf16.msra.mxu0 0
    %399 = vmatprep.subr.bf16.mxu0 0
    %400 = vmatpush1.bf16.msra.mxu0 0
    %401 = vmatprep.subr.bf16.mxu0 0
    %402 = vmatpush1.bf16.msra.mxu0 0
    %403 = vmatprep.subr.bf16.mxu0 0
    %404 = vmatpush1.bf16.msra.mxu0 0
    %405 = vmatprep.mubr.bf16.mxu0 0
    %406 = vmatmul.mubr.bf16.gmra.mrb[0].mxu0 %v171
    %v407 = vpop.f32.mrb[0].mxu0
    %v408 = vadd.f32 0.0, %v407
    %v409 = vpop.f32.mrb[0].mxu0
    %v410 = vpop.f32.mrb[0].mxu0
    %v411 = vadd.f32 0.0, %v410
    %v412 = vpop.f32.mrb[0].mxu0
    %413 = vmatprep.mubr.bf16.mxu0 0
    %414 = vmatmul.mubr.bf16.gmra.mrb[0].mxu0 %v172
    %v415 = vpop.f32.mrb[0].mxu0
    %v416 = vadd.f32 0.0, %v415
    %v417 = vpop.f32.mrb[0].mxu0
    %v418 = vpop.f32.mrb[0].mxu0
    %v419 = vadd.f32 0.0, %v418
    %v420 = vpop.f32.mrb[0].mxu0
    %421 = vmatprep.mubr.bf16.mxu0 0
    %422 = vmatmul.mubr.bf16.gmra.mrb[0].mxu0 %v173
    %v423 = vpop.f32.mrb[0].mxu0
    %v424 = vadd.f32 0.0, %v423
    %v425 = vpop.f32.mrb[0].mxu0
    %v426 = vpop.f32.mrb[0].mxu0
    %v427 = vadd.f32 0.0, %v426
    %v428 = vpop.f32.mrb[0].mxu0
    %429 = vmatprep.mubr.bf16.mxu0 0
    %430 = vmatmul.mubr.bf16.gmra.mrb[0].mxu0 %v174
    %v431 = vpop.f32.mrb[0].mxu0
    %v432 = vadd.f32 0.0, %v431
    %v433 = vpop.f32.mrb[0].mxu0
    %v434 = vpop.f32.mrb[0].mxu0
    %v435 = vadd.f32 0.0, %v434
    %v436 = vpop.f32.mrb[0].mxu0
    %437 = vmatprep.mubr.bf16.mxu0 0
    %438 = vmatmul.mubr.bf16.gmra.mrb[0].mxu0 %v175
    %v439 = vpop.f32.mrb[0].mxu0
    %v440 = vadd.f32 0.0, %v439
    %v441 = vpop.f32.mrb[0].mxu0
    %v442 = vpop.f32.mrb[0].mxu0
    %v443 = vadd.f32 0.0, %v442
    %v444 = vpop.f32.mrb[0].mxu0
    %445 = vmatprep.mubr.bf16.mxu0 0
    %446 = vmatmul.mubr.bf16.gmra.mrb[0].mxu0 %v176
    %v447 = vpop.f32.mrb[0].mxu0
    %v448 = vadd.f32 0.0, %v447
    %v449 = vpop.f32.mrb[0].mxu0
    %v450 = vpop.f32.mrb[0].mxu0
    %v451 = vadd.f32 0.0, %v450
    %v452 = vpop.f32.mrb[0].mxu0
    %453 = vmatprep.mubr.bf16.mxu0 0
    %454 = vmatmul.mubr.bf16.gmra.mrb[0].mxu0 %v177
    %v455 = vpop.f32.mrb[0].mxu0
    %v456 = vadd.f32 0.0, %v455
    %v457 = vpop.f32.mrb[0].mxu0
    %v458 = vpop.f32.mrb[0].mxu0
    %v459 = vadd.f32 0.0, %v458
    %v460 = vpop.f32.mrb[0].mxu0
    %461 = vmatprep.mubr.bf16.mxu0 0
    %462 = vmatmul.mubr.bf16.gmra.mrb[0].mxu0 %v178
    %v463 = vpop.f32.mrb[0].mxu0
    %v464 = vadd.f32 0.0, %v463
    %v465 = vpop.f32.mrb[0].mxu0
    %v466 = vpop.f32.mrb[0].mxu0
    %v467 = vadd.f32 0.0, %v466
    %v468 = vpop.f32.mrb[0].mxu0
    %469 = vdwg.mxu0
    %v470 = vadd.f32 %v357, %v408
    %v471 = vadd.f32 %v358, %v411
    %v472 = vadd.f32 %v359, %v416
    %v473 = vadd.f32 %v360, %v419
    %v474 = vadd.f32 %v361, %v424
    %v475 = vadd.f32 %v362, %v427
    %v476 = vadd.f32 %v363, %v432
    %v477 = vadd.f32 %v364, %v435
    %v478 = vadd.f32 %v365, %v440
    %v479 = vadd.f32 %v366, %v443
    %v480 = vadd.f32 %v367, %v448
    %v481 = vadd.f32 %v368, %v451
    %v482 = vadd.f32 %v369, %v456
    %v483 = vadd.f32 %v370, %v459
    %v484 = vadd.f32 %v371, %v464
    %v485 = vadd.f32 %v372, %v467
    %vm486 = vcmask 7168
    %487 = vst.msk [vmem:[#allocation3] sm:$0xff] %vm486, %v470
    %488 = vst.msk [vmem:[#allocation3 + $0x8] sm:$0xff] %vm486, %v471
    %489 = vst.msk [vmem:[#allocation3 + $0x10] sm:$0xff] %vm486, %v472
    %490 = vst.msk [vmem:[#allocation3 + $0x18] sm:$0xff] %vm486, %v473
    %491 = vst.msk [vmem:[#allocation3 + $0x20] sm:$0xff] %vm486, %v474
    %492 = vst.msk [vmem:[#allocation3 + $0x28] sm:$0xff] %vm486, %v475
    %493 = vst.msk [vmem:[#allocation3 + $0x30] sm:$0xff] %vm486, %v476
    %494 = vst.msk [vmem:[#allocation3 + $0x38] sm:$0xff] %vm486, %v477
    %495 = vst.msk [vmem:[#allocation3 + $0x40] sm:$0xff] %vm486, %v478
    %496 = vst.msk [vmem:[#allocation3 + $0x48] sm:$0xff] %vm486, %v479
    %497 = vst.msk [vmem:[#allocation3 + $0x50] sm:$0xff] %vm486, %v480
    %498 = vst.msk [vmem:[#allocation3 + $0x58] sm:$0xff] %vm486, %v481
    %499 = vst.msk [vmem:[#allocation3 + $0x60] sm:$0xff] %vm486, %v482
    %500 = vst.msk [vmem:[#allocation3 + $0x68] sm:$0xff] %vm486, %v483
    %501 = vst.msk [vmem:[#allocation3 + $0x70] sm:$0xff] %vm486, %v484
    %502 = vst.msk [vmem:[#allocation3 + $0x78] sm:$0xff] %vm486, %v485
    // Predicated region
    $region34: #{tpu_custom_call.1} parent=1 // pred_check
      %p503 = pneg %p29
    $region35: #{tpu_custom_call.1} parent=1 // pred_check_branch
      %505 = sbr.rel (%p503) target = $region37
    $region36: #{tpu_custom_call.1} parent=1 // pred_region
      %v506 = vld [vmem:[#allocation3] sm:$0xff]
      %v507 = vld [vmem:[#allocation3 + $0x8] sm:$0xff]
      %v508 = vld [vmem:[#allocation3 + $0x10] sm:$0xff]
      %v509 = vld [vmem:[#allocation3 + $0x18] sm:$0xff]
      %v510 = vld [vmem:[#allocation3 + $0x20] sm:$0xff]
      %v511 = vld [vmem:[#allocation3 + $0x28] sm:$0xff]
      %v512 = vld [vmem:[#allocation3 + $0x30] sm:$0xff]
      %v513 = vld [vmem:[#allocation3 + $0x38] sm:$0xff]
      %v514 = vld [vmem:[#allocation3 + $0x40] sm:$0xff]
      %v515 = vld [vmem:[#allocation3 + $0x48] sm:$0xff]
      %v516 = vld [vmem:[#allocation3 + $0x50] sm:$0xff]
      %v517 = vld [vmem:[#allocation3 + $0x58] sm:$0xff]
      %v518 = vld [vmem:[#allocation3 + $0x60] sm:$0xff]
      %v519 = vld [vmem:[#allocation3 + $0x68] sm:$0xff]
      %v520 = vld [vmem:[#allocation3 + $0x70] sm:$0xff]
      %v521 = vld [vmem:[#allocation3 + $0x78] sm:$0xff]
      %vm522 = vcmp.gt.f32.partialorder %v506, 0.0
      %vm523 = vcmp.gt.f32.partialorder %v507, 0.0
      %vm524 = vcmp.gt.f32.partialorder %v508, 0.0
      %vm525 = vcmp.gt.f32.partialorder %v509, 0.0
      %vm526 = vcmp.gt.f32.partialorder %v510, 0.0
      %vm527 = vcmp.gt.f32.partialorder %v511, 0.0
      %vm528 = vcmp.gt.f32.partialorder %v512, 0.0
      %vm529 = vcmp.gt.f32.partialorder %v513, 0.0
      %vm530 = vcmp.gt.f32.partialorder %v514, 0.0
      %vm531 = vcmp.gt.f32.partialorder %v515, 0.0
      %vm532 = vcmp.gt.f32.partialorder %v516, 0.0
      %vm533 = vcmp.gt.f32.partialorder %v517, 0.0
      %vm534 = vcmp.gt.f32.partialorder %v518, 0.0
      %vm535 = vcmp.gt.f32.partialorder %v519, 0.0
      %vm536 = vcmp.gt.f32.partialorder %v520, 0.0
      %vm537 = vcmp.gt.f32.partialorder %v521, 0.0
      %v538 = vrcp.pop %v506
      %v539 = vmul.f32 1.0, %v538
      %v540 = vrcp.pop %v507
      %v541 = vmul.f32 1.0, %v540
      %v542 = vrcp.pop %v508
      %v543 = vmul.f32 1.0, %v542
      %v544 = vrcp.pop %v509
      %v545 = vmul.f32 1.0, %v544
      %v546 = vrcp.pop %v510
      %v547 = vmul.f32 1.0, %v546
      %v548 = vrcp.pop %v511
      %v549 = vmul.f32 1.0, %v548
      %v550 = vrcp.pop %v512
      %v551 = vmul.f32 1.0, %v550
      %v552 = vrcp.pop %v513
      %v553 = vmul.f32 1.0, %v552
      %v554 = vrcp.pop %v514
      %v555 = vmul.f32 1.0, %v554
      %v556 = vrcp.pop %v515
      %v557 = vmul.f32 1.0, %v556
      %v558 = vrcp.pop %v516
      %v559 = vmul.f32 1.0, %v558
      %v560 = vrcp.pop %v517
      %v561 = vmul.f32 1.0, %v560
      %v562 = vrcp.pop %v518
      %v563 = vmul.f32 1.0, %v562
      %v564 = vrcp.pop %v519
      %v565 = vmul.f32 1.0, %v564
      %v566 = vrcp.pop %v520
      %v567 = vmul.f32 1.0, %v566
      %v568 = vrcp.pop %v521
      %v569 = vmul.f32 1.0, %v568
      %v570 = vsel %vm522, %v539, 0.0
      %v571 = vsel %vm523, %v541, 0.0
      %v572 = vsel %vm524, %v543, 0.0
      %v573 = vsel %vm525, %v545, 0.0
      %v574 = vsel %vm526, %v547, 0.0
      %v575 = vsel %vm527, %v549, 0.0
      %v576 = vsel %vm528, %v551, 0.0
      %v577 = vsel %vm529, %v553, 0.0
      %v578 = vsel %vm530, %v555, 0.0
      %v579 = vsel %vm531, %v557, 0.0
      %v580 = vsel %vm532, %v559, 0.0
      %v581 = vsel %vm533, %v561, 0.0
      %v582 = vsel %vm534, %v563, 0.0
      %v583 = vsel %vm535, %v565, 0.0
      %v584 = vsel %vm536, %v567, 0.0
      %v585 = vsel %vm537, %v569, 0.0
      %v586 = vld [vmem:[%s6] sm:$0xff]
      %v587 = vld [vmem:[%s6 + $0x8] sm:$0xff]
      %v588 = vld [vmem:[%s6 + $0x10] sm:$0xff]
      %v589 = vld [vmem:[%s6 + $0x18] sm:$0xff]
      %v590 = vld [vmem:[%s6 + $0x20] sm:$0xff]
      %v591 = vld [vmem:[%s6 + $0x28] sm:$0xff]
      %v592 = vld [vmem:[%s6 + $0x30] sm:$0xff]
      %v593 = vld [vmem:[%s6 + $0x38] sm:$0xff]
      %v594 = vld [vmem:[%s6 + $0x40] sm:$0xff]
      %v595 = vld [vmem:[%s6 + $0x48] sm:$0xff]
      %v596 = vld [vmem:[%s6 + $0x50] sm:$0xff]
      %v597 = vld [vmem:[%s6 + $0x58] sm:$0xff]
      %v598 = vld [vmem:[%s6 + $0x60] sm:$0xff]
      %v599 = vld [vmem:[%s6 + $0x68] sm:$0xff]
      %v600 = vld [vmem:[%s6 + $0x70] sm:$0xff]
      %v601 = vld [vmem:[%s6 + $0x78] sm:$0xff]
      %v602 = vmul.f32 %v586, %v570
      %v603 = vmul.f32 %v587, %v571
      %v604 = vmul.f32 %v588, %v572
      %v605 = vmul.f32 %v589, %v573
      %v606 = vmul.f32 %v590, %v574
      %v607 = vmul.f32 %v591, %v575
      %v608 = vmul.f32 %v592, %v576
      %v609 = vmul.f32 %v593, %v577
      %v610 = vmul.f32 %v594, %v578
      %v611 = vmul.f32 %v595, %v579
      %v612 = vmul.f32 %v596, %v580
      %v613 = vmul.f32 %v597, %v581
      %v614 = vmul.f32 %v598, %v582
      %v615 = vmul.f32 %v599, %v583
      %v616 = vmul.f32 %v600, %v584
      %v617 = vmul.f32 %v601, %v585
      %v618 = vsel %vm522, %v586, 0.0
      %v619 = vsel %vm523, %v587, 0.0
      %v620 = vsel %vm524, %v588, 0.0
      %v621 = vsel %vm525, %v589, 0.0
      %v622 = vsel %vm526, %v590, 0.0
      %v623 = vsel %vm527, %v591, 0.0
      %v624 = vsel %vm528, %v592, 0.0
      %v625 = vsel %vm529, %v593, 0.0
      %v626 = vsel %vm530, %v594, 0.0
      %v627 = vsel %vm531, %v595, 0.0
      %v628 = vsel %vm532, %v596, 0.0
      %v629 = vsel %vm533, %v597, 0.0
      %v630 = vsel %vm534, %v598, 0.0
      %v631 = vsel %vm535, %v599, 0.0
      %v632 = vsel %vm536, %v600, 0.0
      %v633 = vsel %vm537, %v601, 0.0
      %v634 = vld [vmem:[#allocation2] sm:$0xff]
      %v635 = vld [vmem:[#allocation2 + $0x8] sm:$0xff]
      %v636 = vld [vmem:[#allocation2 + $0x10] sm:$0xff]
      %v637 = vld [vmem:[#allocation2 + $0x18] sm:$0xff]
      %v638 = vld [vmem:[#allocation2 + $0x20] sm:$0xff]
      %v639 = vld [vmem:[#allocation2 + $0x28] sm:$0xff]
      %v640 = vld [vmem:[#allocation2 + $0x30] sm:$0xff]
      %v641 = vld [vmem:[#allocation2 + $0x38] sm:$0xff]
      %v642 = vld [vmem:[#allocation2 + $0x40] sm:$0xff]
      %v643 = vld [vmem:[#allocation2 + $0x48] sm:$0xff]
      %v644 = vld [vmem:[#allocation2 + $0x50] sm:$0xff]
      %v645 = vld [vmem:[#allocation2 + $0x58] sm:$0xff]
      %v646 = vld [vmem:[#allocation2 + $0x60] sm:$0xff]
      %v647 = vld [vmem:[#allocation2 + $0x68] sm:$0xff]
      %v648 = vld [vmem:[#allocation2 + $0x70] sm:$0xff]
      %v649 = vld [vmem:[#allocation2 + $0x78] sm:$0xff]
      %v650 = vld [vmem:[%s2] sm:$0xff]
      %v652 = vsel %vm340, %v634, 0
      %v655 = vsel %vm340, %v635, 0
      %v658 = vsel %vm340, %v636, 0
      %v661 = vsel %vm340, %v637, 0
      %v664 = vsel %vm340, %v638, 0
      %v667 = vsel %vm340, %v639, 0
      %v670 = vsel %vm340, %v640, 0
      %v673 = vsel %vm340, %v641, 0
      %v676 = vsel %vm340, %v642, 0
      %v679 = vsel %vm340, %v643, 0
      %v682 = vsel %vm340, %v644, 0
      %v685 = vsel %vm340, %v645, 0
      %v688 = vsel %vm340, %v646, 0
      %v691 = vsel %vm340, %v647, 0
      %v694 = vsel %vm340, %v648, 0
      %v697 = vsel %vm340, %v649, 0
      %699 = vmatprep.subr.mxu0 0.0
      %700 = vmatpush1.msra.mxu0 %v650
      %701 = vmatprep.subr.mxu0 0.0
      %702 = vmatpush1.msra.mxu0 0.0
      %703 = vmatprep.subr.mxu0 0.0
      %704 = vmatpush1.msra.mxu0 0.0
      %705 = vmatprep.subr.mxu0 0.0
      %706 = vmatpush1.msra.mxu0 0.0
      %707 = vmatprep.subr.mxu0 0.0
      %708 = vmatpush1.msra.mxu0 0.0
      %709 = vmatprep.subr.mxu0 0.0
      %710 = vmatpush1.msra.mxu0 0.0
      %711 = vmatprep.subr.mxu0 0.0
      %712 = vmatpush1.msra.mxu0 0.0
      %713 = vmatprep.subr.mxu0 0.0
      %714 = vmatpush1.msra.mxu0 0.0
      %715 = vmatprep.subr.mxu0 0.0
      %716 = vmatpush1.msra.mxu0 0.0
      %717 = vmatprep.subr.mxu0 0.0
      %718 = vmatpush1.msra.mxu0 0.0
      %719 = vmatprep.subr.mxu0 0.0
      %720 = vmatpush1.msra.mxu0 0.0
      %721 = vmatprep.subr.mxu0 0.0
      %722 = vmatpush1.msra.mxu0 0.0
      %723 = vmatprep.subr.mxu0 0.0
      %724 = vmatpush1.msra.mxu0 0.0
      %725 = vmatprep.subr.mxu0 0.0
      %726 = vmatpush1.msra.mxu0 0.0
      %727 = vmatprep.subr.mxu0 0.0
      %728 = vmatpush1.msra.mxu0 0.0
      %729 = vmatprep.subr.mxu0 0.0
      %730 = vmatpush1.msra.mxu0 0.0
      %731 = vmatprep.subr.mxu0 0.0
      %732 = vmatpush1.msra.mxu0 0.0
      %733 = vmatprep.subr.mxu0 0.0
      %734 = vmatpush1.msra.mxu0 0.0
      %735 = vmatprep.subr.mxu0 0.0
      %736 = vmatpush1.msra.mxu0 0.0
      %737 = vmatprep.subr.mxu0 0.0
      %738 = vmatpush1.msra.mxu0 0.0
      %739 = vmatprep.subr.mxu0 0.0
      %740 = vmatpush1.msra.mxu0 0.0
      %741 = vmatprep.subr.mxu0 0.0
      %742 = vmatpush1.msra.mxu0 0.0
      %743 = vmatprep.subr.mxu0 0.0
      %744 = vmatpush1.msra.mxu0 0.0
      %745 = vmatprep.subr.mxu0 0.0
      %746 = vmatpush1.msra.mxu0 0.0
      %747 = vmatprep.subr.mxu0 0.0
      %748 = vmatpush1.msra.mxu0 0.0
      %749 = vmatprep.subr.mxu0 0.0
      %750 = vmatpush1.msra.mxu0 0.0
      %751 = vmatprep.subr.mxu0 0.0
      %752 = vmatpush1.msra.mxu0 0.0
      %753 = vmatprep.subr.mxu0 0.0
      %754 = vmatpush1.msra.mxu0 0.0
      %755 = vmatprep.subr.mxu0 0.0
      %756 = vmatpush1.msra.mxu0 0.0
      %757 = vmatprep.subr.mxu0 0.0
      %758 = vmatpush1.msra.mxu0 0.0
      %759 = vmatprep.subr.mxu0 0.0
      %760 = vmatpush1.msra.mxu0 0.0
      %761 = vmatprep.subr.mxu0 0.0
      %762 = vmatpush1.msra.mxu0 0.0
      %763 = vmatprep.mubr.f32.mxu0 0.0
      %764 = vmatmul.mubr.f32.gmra.mrb[0].mxu0 %v652
      %v765 = vpop.f32.mrb[0].mxu0
      %v766 = vadd.f32 0.0, %v765
      %v767 = vpop.f32.mrb[0].mxu0
      %768 = vmatprep.mubr.f32.mxu0 0.0
      %769 = vmatmul.mubr.f32.gmra.mrb[0].mxu0 %v655
      %v770 = vpop.f32.mrb[0].mxu0
      %v771 = vadd.f32 0.0, %v770
      %v772 = vpop.f32.mrb[0].mxu0
      %773 = vmatprep.mubr.f32.mxu0 0.0
      %774 = vmatmul.mubr.f32.gmra.mrb[0].mxu0 %v658
      %v775 = vpop.f32.mrb[0].mxu0
      %v776 = vadd.f32 0.0, %v775
      %v777 = vpop.f32.mrb[0].mxu0
      %778 = vmatprep.mubr.f32.mxu0 0.0
      %779 = vmatmul.mubr.f32.gmra.mrb[0].mxu0 %v661
      %v780 = vpop.f32.mrb[0].mxu0
      %v781 = vadd.f32 0.0, %v780
      %v782 = vpop.f32.mrb[0].mxu0
      %783 = vmatprep.mubr.f32.mxu0 0.0
      %784 = vmatmul.mubr.f32.gmra.mrb[0].mxu0 %v664
      %v785 = vpop.f32.mrb[0].mxu0
      %v786 = vadd.f32 0.0, %v785
      %v787 = vpop.f32.mrb[0].mxu0
      %788 = vmatprep.mubr.f32.mxu0 0.0
      %789 = vmatmul.mubr.f32.gmra.mrb[0].mxu0 %v667
      %v790 = vpop.f32.mrb[0].mxu0
      %v791 = vadd.f32 0.0, %v790
      %v792 = vpop.f32.mrb[0].mxu0
      %793 = vmatprep.mubr.f32.mxu0 0.0
      %794 = vmatmul.mubr.f32.gmra.mrb[0].mxu0 %v670
      %v795 = vpop.f32.mrb[0].mxu0
      %v796 = vadd.f32 0.0, %v795
      %v797 = vpop.f32.mrb[0].mxu0
      %798 = vmatprep.mubr.f32.mxu0 0.0
      %799 = vmatmul.mubr.f32.gmra.mrb[0].mxu0 %v673
      %v800 = vpop.f32.mrb[0].mxu0
      %v801 = vadd.f32 0.0, %v800
      %v802 = vpop.f32.mrb[0].mxu0
      %803 = vmatprep.mubr.f32.mxu0 0.0
      %804 = vmatmul.mubr.f32.gmra.mrb[0].mxu0 %v676
      %v805 = vpop.f32.mrb[0].mxu0
      %v806 = vadd.f32 0.0, %v805
      %v807 = vpop.f32.mrb[0].mxu0
      %808 = vmatprep.mubr.f32.mxu0 0.0
      %809 = vmatmul.mubr.f32.gmra.mrb[0].mxu0 %v679
      %v810 = vpop.f32.mrb[0].mxu0
      %v811 = vadd.f32 0.0, %v810
      %v812 = vpop.f32.mrb[0].mxu0
      %813 = vmatprep.mubr.f32.mxu0 0.0
      %814 = vmatmul.mubr.f32.gmra.mrb[0].mxu0 %v682
      %v815 = vpop.f32.mrb[0].mxu0
      %v816 = vadd.f32 0.0, %v815
      %v817 = vpop.f32.mrb[0].mxu0
      %818 = vmatprep.mubr.f32.mxu0 0.0
      %819 = vmatmul.mubr.f32.gmra.mrb[0].mxu0 %v685
      %v820 = vpop.f32.mrb[0].mxu0
      %v821 = vadd.f32 0.0, %v820
      %v822 = vpop.f32.mrb[0].mxu0
      %823 = vmatprep.mubr.f32.mxu0 0.0
      %824 = vmatmul.mubr.f32.gmra.mrb[0].mxu0 %v688
      %v825 = vpop.f32.mrb[0].mxu0
      %v826 = vadd.f32 0.0, %v825
      %v827 = vpop.f32.mrb[0].mxu0
      %828 = vmatprep.mubr.f32.mxu0 0.0
      %829 = vmatmul.mubr.f32.gmra.mrb[0].mxu0 %v691
      %v830 = vpop.f32.mrb[0].mxu0
      %v831 = vadd.f32 0.0, %v830
      %v832 = vpop.f32.mrb[0].mxu0
      %833 = vmatprep.mubr.f32.mxu0 0.0
      %834 = vmatmul.mubr.f32.gmra.mrb[0].mxu0 %v694
      %v835 = vpop.f32.mrb[0].mxu0
      %v836 = vadd.f32 0.0, %v835
      %v837 = vpop.f32.mrb[0].mxu0
      %838 = vmatprep.mubr.f32.mxu0 0.0
      %839 = vmatmul.mubr.f32.gmra.mrb[0].mxu0 %v697
      %v840 = vpop.f32.mrb[0].mxu0
      %v841 = vadd.f32 0.0, %v840
      %v842 = vpop.f32.mrb[0].mxu0
      %843 = vdwg.mxu0
      %845 = vset.pattern.permute.xlu0 0
      %846 = vperm.xlu0 %845, %v602
      %v847 = vpop.permute.xlu0 %846
      %850 = vset.pattern.permute.xlu0 0
      %851 = vperm.xlu0 %850, %v603
      %v852 = vpop.permute.xlu0 %851
      %855 = vset.pattern.permute.xlu0 0
      %856 = vperm.xlu0 %855, %v604
      %v857 = vpop.permute.xlu0 %856
      %860 = vset.pattern.permute.xlu0 0
      %861 = vperm.xlu0 %860, %v605
      %v862 = vpop.permute.xlu0 %861
      %865 = vset.pattern.permute.xlu0 0
      %866 = vperm.xlu0 %865, %v606
      %v867 = vpop.permute.xlu0 %866
      %870 = vset.pattern.permute.xlu0 0
      %871 = vperm.xlu0 %870, %v607
      %v872 = vpop.permute.xlu0 %871
      %875 = vset.pattern.permute.xlu0 0
      %876 = vperm.xlu0 %875, %v608
      %v877 = vpop.permute.xlu0 %876
      %880 = vset.pattern.permute.xlu0 0
      %881 = vperm.xlu0 %880, %v609
      %v882 = vpop.permute.xlu0 %881
      %885 = vset.pattern.permute.xlu0 0
      %886 = vperm.xlu0 %885, %v610
      %v887 = vpop.permute.xlu0 %886
      %890 = vset.pattern.permute.xlu0 0
      %891 = vperm.xlu0 %890, %v611
      %v892 = vpop.permute.xlu0 %891
      %895 = vset.pattern.permute.xlu0 0
      %896 = vperm.xlu0 %895, %v612
      %v897 = vpop.permute.xlu0 %896
      %900 = vset.pattern.permute.xlu0 0
      %901 = vperm.xlu0 %900, %v613
      %v902 = vpop.permute.xlu0 %901
      %905 = vset.pattern.permute.xlu0 0
      %906 = vperm.xlu0 %905, %v614
      %v907 = vpop.permute.xlu0 %906
      %910 = vset.pattern.permute.xlu0 0
      %911 = vperm.xlu0 %910, %v615
      %v912 = vpop.permute.xlu0 %911
      %915 = vset.pattern.permute.xlu0 0
      %916 = vperm.xlu0 %915, %v616
      %v917 = vpop.permute.xlu0 %916
      %920 = vset.pattern.permute.xlu0 0
      %921 = vperm.xlu0 %920, %v617
      %v922 = vpop.permute.xlu0 %921
      %v924 = vmul.f32 %v766, %v847
      %v925 = vmul.f32 %v771, %v852
      %v926 = vmul.f32 %v776, %v857
      %v927 = vmul.f32 %v781, %v862
      %v928 = vmul.f32 %v786, %v867
      %v929 = vmul.f32 %v791, %v872
      %v930 = vmul.f32 %v796, %v877
      %v931 = vmul.f32 %v801, %v882
      %v932 = vmul.f32 %v806, %v887
      %v933 = vmul.f32 %v811, %v892
      %v934 = vmul.f32 %v816, %v897
      %v935 = vmul.f32 %v821, %v902
      %v936 = vmul.f32 %v826, %v907
      %v937 = vmul.f32 %v831, %v912
      %v938 = vmul.f32 %v836, %v917
      %v939 = vmul.f32 %v841, %v922
      %v940 = vld [vmem:[%s3] sm:$0x1]
      %942 = vset.pattern.permute.xlu0 0
      %943 = vperm.xlu0 %942, %v618
      %v944 = vpop.permute.xlu0 %943
      %947 = vset.pattern.permute.xlu0 0
      %948 = vperm.xlu0 %947, %v619
      %v949 = vpop.permute.xlu0 %948
      %952 = vset.pattern.permute.xlu0 0
      %953 = vperm.xlu0 %952, %v620
      %v954 = vpop.permute.xlu0 %953
      %957 = vset.pattern.permute.xlu0 0
      %958 = vperm.xlu0 %957, %v621
      %v959 = vpop.permute.xlu0 %958
      %962 = vset.pattern.permute.xlu0 0
      %963 = vperm.xlu0 %962, %v622
      %v964 = vpop.permute.xlu0 %963
      %967 = vset.pattern.permute.xlu0 0
      %968 = vperm.xlu0 %967, %v623
      %v969 = vpop.permute.xlu0 %968
      %972 = vset.pattern.permute.xlu0 0
      %973 = vperm.xlu0 %972, %v624
      %v974 = vpop.permute.xlu0 %973
      %977 = vset.pattern.permute.xlu0 0
      %978 = vperm.xlu0 %977, %v625
      %v979 = vpop.permute.xlu0 %978
      %982 = vset.pattern.permute.xlu0 0
      %983 = vperm.xlu0 %982, %v626
      %v984 = vpop.permute.xlu0 %983
      %987 = vset.pattern.permute.xlu0 0
      %988 = vperm.xlu0 %987, %v627
      %v989 = vpop.permute.xlu0 %988
      %992 = vset.pattern.permute.xlu0 0
      %993 = vperm.xlu0 %992, %v628
      %v994 = vpop.permute.xlu0 %993
      %997 = vset.pattern.permute.xlu0 0
      %998 = vperm.xlu0 %997, %v629
      %v999 = vpop.permute.xlu0 %998
      %1002 = vset.pattern.permute.xlu0 0
      %1003 = vperm.xlu0 %1002, %v630
      %v1004 = vpop.permute.xlu0 %1003
      %1007 = vset.pattern.permute.xlu0 0
      %1008 = vperm.xlu0 %1007, %v631
      %v1009 = vpop.permute.xlu0 %1008
      %1012 = vset.pattern.permute.xlu0 0
      %1013 = vperm.xlu0 %1012, %v632
      %v1014 = vpop.permute.xlu0 %1013
      %1017 = vset.pattern.permute.xlu0 0
      %1018 = vperm.xlu0 %1017, %v633
      %v1019 = vpop.permute.xlu0 %1018
      %v1022 = vlaneseq
      %v1023 = vshrl.u32 %v1022, 7
      %v1024 = vsub.s32 0, %v1023
      %v1025 = vrot.slane %v940, %v1024
      %v1027 = vmul.f32 %v944, %v1025
      %v1028 = vmul.f32 %v949, %v1025
      %v1029 = vmul.f32 %v954, %v1025
      %v1030 = vmul.f32 %v959, %v1025
      %v1031 = vmul.f32 %v964, %v1025
      %v1032 = vmul.f32 %v969, %v1025
      %v1033 = vmul.f32 %v974, %v1025
      %v1034 = vmul.f32 %v979, %v1025
      %v1035 = vmul.f32 %v984, %v1025
      %v1036 = vmul.f32 %v989, %v1025
      %v1037 = vmul.f32 %v994, %v1025
      %v1038 = vmul.f32 %v999, %v1025
      %v1039 = vmul.f32 %v1004, %v1025
      %v1040 = vmul.f32 %v1009, %v1025
      %v1041 = vmul.f32 %v1014, %v1025
      %v1042 = vmul.f32 %v1019, %v1025
      %v1043 = vadd.f32 %v924, %v1027
      %v1044 = vadd.f32 %v925, %v1028
      %v1045 = vadd.f32 %v926, %v1029
      %v1046 = vadd.f32 %v927, %v1030
      %v1047 = vadd.f32 %v928, %v1031
      %v1048 = vadd.f32 %v929, %v1032
      %v1049 = vadd.f32 %v930, %v1033
      %v1050 = vadd.f32 %v931, %v1034
      %v1051 = vadd.f32 %v932, %v1035
      %v1052 = vadd.f32 %v933, %v1036
      %v1053 = vadd.f32 %v934, %v1037
      %v1054 = vadd.f32 %v935, %v1038
      %v1055 = vadd.f32 %v936, %v1039
      %v1056 = vadd.f32 %v937, %v1040
      %v1057 = vadd.f32 %v938, %v1041
      %v1058 = vadd.f32 %v939, %v1042
      %v1059 = vmax.f32 %v1043, 0.0
      %v1060 = vmax.f32 %v1044, 0.0
      %v1061 = vmax.f32 %v1045, 0.0
      %v1062 = vmax.f32 %v1046, 0.0
      %v1063 = vmax.f32 %v1047, 0.0
      %v1064 = vmax.f32 %v1048, 0.0
      %v1065 = vmax.f32 %v1049, 0.0
      %v1066 = vmax.f32 %v1050, 0.0
      %v1067 = vmax.f32 %v1051, 0.0
      %v1068 = vmax.f32 %v1052, 0.0
      %v1069 = vmax.f32 %v1053, 0.0
      %v1070 = vmax.f32 %v1054, 0.0
      %v1071 = vmax.f32 %v1055, 0.0
      %v1072 = vmax.f32 %v1056, 0.0
      %v1073 = vmax.f32 %v1057, 0.0
      %v1074 = vmax.f32 %v1058, 0.0
      %v1075 = vld [vmem:[%s4] sm:$0xff]
      %v1076 = vld [vmem:[%s4 + $0x8] sm:$0xff]
      %v1077 = vld [vmem:[%s4 + $0x10] sm:$0xff]
      %v1078 = vld [vmem:[%s4 + $0x18] sm:$0xff]
      %v1079 = vld [vmem:[%s4 + $0x20] sm:$0xff]
      %v1080 = vld [vmem:[%s4 + $0x28] sm:$0xff]
      %v1081 = vld [vmem:[%s4 + $0x30] sm:$0xff]
      %v1082 = vld [vmem:[%s4 + $0x38] sm:$0xff]
      %v1083 = vld [vmem:[%s4 + $0x40] sm:$0xff]
      %v1084 = vld [vmem:[%s4 + $0x48] sm:$0xff]
      %v1085 = vld [vmem:[%s4 + $0x50] sm:$0xff]
      %v1086 = vld [vmem:[%s4 + $0x58] sm:$0xff]
      %v1087 = vld [vmem:[%s4 + $0x60] sm:$0xff]
      %v1088 = vld [vmem:[%s4 + $0x68] sm:$0xff]
      %v1089 = vld [vmem:[%s4 + $0x70] sm:$0xff]
      %v1090 = vld [vmem:[%s4 + $0x78] sm:$0xff]
      %v1091 = vld [vmem:[%s5] sm:$0x1]
      %v1093 = vlaneseq
      %v1094 = vshrl.u32 %v1093, 7
      %v1095 = vsub.s32 0, %v1094
      %v1096 = vrot.slane %v1091, %v1095
      %1098 = vmatprep.subr.mxu0 0.0
      %1099 = vmatpush1.msra.mxu0 %v1075
      %1100 = vmatprep.subr.mxu0 0.0
      %1101 = vmatpush1.msra.mxu0 %v1076
      %1102 = vmatprep.subr.mxu0 0.0
      %1103 = vmatpush1.msra.mxu0 %v1077
      %1104 = vmatprep.subr.mxu0 0.0
      %1105 = vmatpush1.msra.mxu0 %v1078
      %1106 = vmatprep.subr.mxu0 0.0
      %1107 = vmatpush1.msra.mxu0 %v1079
      %1108 = vmatprep.subr.mxu0 0.0
      %1109 = vmatpush1.msra.mxu0 %v1080
      %1110 = vmatprep.subr.mxu0 0.0
      %1111 = vmatpush1.msra.mxu0 %v1081
      %1112 = vmatprep.subr.mxu0 0.0
      %1113 = vmatpush1.msra.mxu0 %v1082
      %1114 = vmatprep.subr.mxu0 0.0
      %1115 = vmatpush1.msra.mxu0 %v1083
      %1116 = vmatprep.subr.mxu0 0.0
      %1117 = vmatpush1.msra.mxu0 %v1084
      %1118 = vmatprep.subr.mxu0 0.0
      %1119 = vmatpush1.msra.mxu0 %v1085
      %1120 = vmatprep.subr.mxu0 0.0
      %1121 = vmatpush1.msra.mxu0 %v1086
      %1122 = vmatprep.subr.mxu0 0.0
      %1123 = vmatpush1.msra.mxu0 %v1087
      %1124 = vmatprep.subr.mxu0 0.0
      %1125 = vmatpush1.msra.mxu0 %v1088
      %1126 = vmatprep.subr.mxu0 0.0
      %1127 = vmatpush1.msra.mxu0 %v1089
      %1128 = vmatprep.subr.mxu0 0.0
      %1129 = vmatpush1.msra.mxu0 %v1090
      %1130 = vmatprep.subr.mxu0 0.0
      %1131 = vmatpush1.msra.mxu0 0.0
      %1132 = vmatprep.subr.mxu0 0.0
      %1133 = vmatpush1.msra.mxu0 0.0
      %1134 = vmatprep.subr.mxu0 0.0
      %1135 = vmatpush1.msra.mxu0 0.0
      %1136 = vmatprep.subr.mxu0 0.0
      %1137 = vmatpush1.msra.mxu0 0.0
      %1138 = vmatprep.subr.mxu0 0.0
      %1139 = vmatpush1.msra.mxu0 0.0
      %1140 = vmatprep.subr.mxu0 0.0
      %1141 = vmatpush1.msra.mxu0 0.0
      %1142 = vmatprep.subr.mxu0 0.0
      %1143 = vmatpush1.msra.mxu0 0.0
      %1144 = vmatprep.subr.mxu0 0.0
      %1145 = vmatpush1.msra.mxu0 0.0
      %1146 = vmatprep.subr.mxu0 0.0
      %1147 = vmatpush1.msra.mxu0 0.0
      %1148 = vmatprep.subr.mxu0 0.0
      %1149 = vmatpush1.msra.mxu0 0.0
      %1150 = vmatprep.subr.mxu0 0.0
      %1151 = vmatpush1.msra.mxu0 0.0
      %1152 = vmatprep.subr.mxu0 0.0
      %1153 = vmatpush1.msra.mxu0 0.0
      %1154 = vmatprep.subr.mxu0 0.0
      %1155 = vmatpush1.msra.mxu0 0.0
      %1156 = vmatprep.subr.mxu0 0.0
      %1157 = vmatpush1.msra.mxu0 0.0
      %1158 = vmatprep.subr.mxu0 0.0
      %1159 = vmatpush1.msra.mxu0 0.0
      %1160 = vmatprep.subr.mxu0 0.0
      %1161 = vmatpush1.msra.mxu0 0.0
      %1162 = vmatprep.mubr.f32.mxu0 0.0
      %1163 = vmatmul.mubr.f32.gmra.mrb[0].mxu0 %v1059
      %v1164 = vpop.f32.mrb[0].mxu0
      %v1165 = vadd.f32 %v1096, %v1164
      %v1166 = vpop.f32.mrb[0].mxu0
      %1167 = vmatprep.mubr.f32.mxu0 0.0
      %1168 = vmatmul.mubr.f32.gmra.mrb[0].mxu0 %v1060
      %v1169 = vpop.f32.mrb[0].mxu0
      %v1170 = vadd.f32 %v1096, %v1169
      %v1171 = vpop.f32.mrb[0].mxu0
      %1172 = vmatprep.mubr.f32.mxu0 0.0
      %1173 = vmatmul.mubr.f32.gmra.mrb[0].mxu0 %v1061
      %v1174 = vpop.f32.mrb[0].mxu0
      %v1175 = vadd.f32 %v1096, %v1174
      %v1176 = vpop.f32.mrb[0].mxu0
      %1177 = vmatprep.mubr.f32.mxu0 0.0
      %1178 = vmatmul.mubr.f32.gmra.mrb[0].mxu0 %v1062
      %v1179 = vpop.f32.mrb[0].mxu0
      %v1180 = vadd.f32 %v1096, %v1179
      %v1181 = vpop.f32.mrb[0].mxu0
      %1182 = vmatprep.mubr.f32.mxu0 0.0
      %1183 = vmatmul.mubr.f32.gmra.mrb[0].mxu0 %v1063
      %v1184 = vpop.f32.mrb[0].mxu0
      %v1185 = vadd.f32 %v1096, %v1184
      %v1186 = vpop.f32.mrb[0].mxu0
      %1187 = vmatprep.mubr.f32.mxu0 0.0
      %1188 = vmatmul.mubr.f32.gmra.mrb[0].mxu0 %v1064
      %v1189 = vpop.f32.mrb[0].mxu0
      %v1190 = vadd.f32 %v1096, %v1189
      %v1191 = vpop.f32.mrb[0].mxu0
      %1192 = vmatprep.mubr.f32.mxu0 0.0
      %1193 = vmatmul.mubr.f32.gmra.mrb[0].mxu0 %v1065
      %v1194 = vpop.f32.mrb[0].mxu0
      %v1195 = vadd.f32 %v1096, %v1194
      %v1196 = vpop.f32.mrb[0].mxu0
      %1197 = vmatprep.mubr.f32.mxu0 0.0
      %1198 = vmatmul.mubr.f32.gmra.mrb[0].mxu0 %v1066
      %v1199 = vpop.f32.mrb[0].mxu0
      %v1200 = vadd.f32 %v1096, %v1199
      %v1201 = vpop.f32.mrb[0].mxu0
      %1202 = vmatprep.mubr.f32.mxu0 0.0
      %1203 = vmatmul.mubr.f32.gmra.mrb[0].mxu0 %v1067
      %v1204 = vpop.f32.mrb[0].mxu0
      %v1205 = vadd.f32 %v1096, %v1204
      %v1206 = vpop.f32.mrb[0].mxu0
      %1207 = vmatprep.mubr.f32.mxu0 0.0
      %1208 = vmatmul.mubr.f32.gmra.mrb[0].mxu0 %v1068
      %v1209 = vpop.f32.mrb[0].mxu0
      %v1210 = vadd.f32 %v1096, %v1209
      %v1211 = vpop.f32.mrb[0].mxu0
      %1212 = vmatprep.mubr.f32.mxu0 0.0
      %1213 = vmatmul.mubr.f32.gmra.mrb[0].mxu0 %v1069
      %v1214 = vpop.f32.mrb[0].mxu0
      %v1215 = vadd.f32 %v1096, %v1214
      %v1216 = vpop.f32.mrb[0].mxu0
      %1217 = vmatprep.mubr.f32.mxu0 0.0
      %1218 = vmatmul.mubr.f32.gmra.mrb[0].mxu0 %v1070
      %v1219 = vpop.f32.mrb[0].mxu0
      %v1220 = vadd.f32 %v1096, %v1219
      %v1221 = vpop.f32.mrb[0].mxu0
      %1222 = vmatprep.mubr.f32.mxu0 0.0
      %1223 = vmatmul.mubr.f32.gmra.mrb[0].mxu0 %v1071
      %v1224 = vpop.f32.mrb[0].mxu0
      %v1225 = vadd.f32 %v1096, %v1224
      %v1226 = vpop.f32.mrb[0].mxu0
      %1227 = vmatprep.mubr.f32.mxu0 0.0
      %1228 = vmatmul.mubr.f32.gmra.mrb[0].mxu0 %v1072
      %v1229 = vpop.f32.mrb[0].mxu0
      %v1230 = vadd.f32 %v1096, %v1229
      %v1231 = vpop.f32.mrb[0].mxu0
      %1232 = vmatprep.mubr.f32.mxu0 0.0
      %1233 = vmatmul.mubr.f32.gmra.mrb[0].mxu0 %v1073
      %v1234 = vpop.f32.mrb[0].mxu0
      %v1235 = vadd.f32 %v1096, %v1234
      %v1236 = vpop.f32.mrb[0].mxu0
      %1237 = vmatprep.mubr.f32.mxu0 0.0
      %1238 = vmatmul.mubr.f32.gmra.mrb[0].mxu0 %v1074
      %v1239 = vpop.f32.mrb[0].mxu0
      %v1240 = vadd.f32 %v1096, %v1239
      %v1241 = vpop.f32.mrb[0].mxu0
      %1242 = vdwg.mxu0
      %v1243 = vpack.c.bf16 %v1170, %v1165
      %v1244 = vpack.c.bf16 %v1180, %v1175
      %v1245 = vpack.c.bf16 %v1190, %v1185
      %v1246 = vpack.c.bf16 %v1200, %v1195
      %v1247 = vpack.c.bf16 %v1210, %v1205
      %v1248 = vpack.c.bf16 %v1220, %v1215
      %v1249 = vpack.c.bf16 %v1230, %v1225
      %v1250 = vpack.c.bf16 %v1240, %v1235
      %v1259 = vunpack.c.l.b16 %v1243
      %v1260 = vunpack.c.h.b16 %v1243
      %v1261 = vunpack.c.l.b16 %v1244
      %v1262 = vunpack.c.h.b16 %v1244
      %v1263 = vunpack.c.l.b16 %v1245
      %v1264 = vunpack.c.h.b16 %v1245
      %v1265 = vunpack.c.l.b16 %v1246
      %v1266 = vunpack.c.h.b16 %v1246
      %v1267 = vunpack.c.l.b16 %v1247
      %v1268 = vunpack.c.h.b16 %v1247
      %v1269 = vunpack.c.l.b16 %v1248
      %v1270 = vunpack.c.h.b16 %v1248
      %v1271 = vunpack.c.l.b16 %v1249
      %v1272 = vunpack.c.h.b16 %v1249
      %v1273 = vunpack.c.l.b16 %v1250
      %v1274 = vunpack.c.h.b16 %v1250
      %v1275 = vpack.c.b16 %v1259, %v1259
      %v1276 = vpack.c.b16 %v1260, %v1260
      %v1277 = vpack.c.b16 %v1261, %v1261
      %v1278 = vpack.c.b16 %v1262, %v1262
      %v1279 = vpack.c.b16 %v1263, %v1263
      %v1280 = vpack.c.b16 %v1264, %v1264
      %v1281 = vpack.c.b16 %v1265, %v1265
      %v1282 = vpack.c.b16 %v1266, %v1266
      %v1283 = vpack.c.b16 %v1267, %v1267
      %v1284 = vpack.c.b16 %v1268, %v1268
      %v1285 = vpack.c.b16 %v1269, %v1269
      %v1286 = vpack.c.b16 %v1270, %v1270
      %v1287 = vpack.c.b16 %v1271, %v1271
      %v1288 = vpack.c.b16 %v1272, %v1272
      %v1289 = vpack.c.b16 %v1273, %v1273
      %v1290 = vpack.c.b16 %v1274, %v1274
      %1307 = vst [vmem:[#allocation4] sm:$0xf] %v1275
      %1308 = vst [vmem:[#allocation4 + $0x4] sm:$0xf] %v1276
      %1309 = vst [vmem:[#allocation4 + $0x8] sm:$0xf] %v1277
      %1310 = vst [vmem:[#allocation4 + $0xc] sm:$0xf] %v1278
      %1311 = vst [vmem:[#allocation4 + $0x10] sm:$0xf] %v1279
      %1312 = vst [vmem:[#allocation4 + $0x14] sm:$0xf] %v1280
      %1313 = vst [vmem:[#allocation4 + $0x18] sm:$0xf] %v1281
      %1314 = vst [vmem:[#allocation4 + $0x1c] sm:$0xf] %v1282
      %1315 = vst [vmem:[#allocation4 + $0x20] sm:$0xf] %v1283
      %1316 = vst [vmem:[#allocation4 + $0x24] sm:$0xf] %v1284
      %1317 = vst [vmem:[#allocation4 + $0x28] sm:$0xf] %v1285
      %1318 = vst [vmem:[#allocation4 + $0x2c] sm:$0xf] %v1286
      %1319 = vst [vmem:[#allocation4 + $0x30] sm:$0xf] %v1287
      %1320 = vst [vmem:[#allocation4 + $0x34] sm:$0xf] %v1288
      %1321 = vst [vmem:[#allocation4 + $0x38] sm:$0xf] %v1289
      %1322 = vst [vmem:[#allocation4 + $0x3c] sm:$0xf] %v1290
    $region37: #{tpu_custom_call.1} parent=1 // pred_fallthru
      _
    // Predicated region
    $region38: #{tpu_custom_call.1} parent=1 // pred_check
      _
    $region39: #{tpu_custom_call.1} parent=1 // pred_check_branch
      %1324 = sbr.rel (0) target = $region41
    $region40: #{tpu_custom_call.1} parent=1 // pred_region
      %s1326 = ssub.s32 1024, 1024
      %1327 = vsyncadd [#allocation5], %s1326
      %s1328 = sshll.u32 [#allocation4], 4
      %s1329 = int_to_ptr.vmem [resolvable:$true] %s1328
      %1334 = dma.vmem_to_hbm [thread:$0]  %s1329, 1024, %s7, [#allocation5], 64, 64, 4
    $region41: #{tpu_custom_call.1} parent=1 // pred_fallthru
      _
    // Predicated region
    $region42: #{tpu_custom_call.1} parent=1 // pred_check
      _
    $region43: #{tpu_custom_call.1} parent=1 // pred_check_branch
      %1336 = sbr.rel (0) target = $region45
    $region44: #{tpu_custom_call.1} parent=1 // pred_region
      %1337 = dma.done [#allocation5], 1024
    $region45: #{tpu_custom_call.1} parent=1 // pred_fallthru
      _
    %1338 = vsyncpa [#allocation5], 1

</llo_original>
